<compile_context>
chip_gen: v7x
topology: tpu7x:2x2x1
jax: 0.10.0
libtpu: 0.0.40
codegen_flags: <defaults>
</compile_context>

<pallas_src>
import jax
import jax.numpy as jnp
from jax.experimental import pallas as pl
from jax.experimental.pallas import tpu as pltpu


# ----------------------------- in-kernel helpers -----------------------------

def _projection_head(x_bf16, w1_bf16, b1, w2_bf16, b2, g, beta):
    """PyTorch ProjectionHead: Linear -> GELU -> Linear -> (dropout=id) -> residual -> LayerNorm.

    MXU operands are bf16 with f32 accumulation; all elementwise epilogue math stays f32
    (v5e has no bf16 VPU/EUP, so f32 is the right choice on every generation).
    """
    projected = jnp.dot(x_bf16, w1_bf16, preferred_element_type=jnp.float32) + b1
    # tanh GELU routes through the EUP (own VLIW slot, effectively free) instead of a
    # multi-op VALU erf polynomial; tiny numeric diff vs PyTorch's exact-erf default.
    h = jax.nn.gelu(projected, approximate=True)
    h = jnp.dot(h.astype(jnp.bfloat16), w2_bf16, preferred_element_type=jnp.float32) + b2
    # TODO(synk): nn.Dropout(p=0.1) treated as identity (deterministic / eval-mode semantics).
    y = h + projected
    mean = jnp.mean(y, axis=-1, keepdims=True)
    var = jnp.mean((y - mean) ** 2, axis=-1, keepdims=True)
    return (y - mean) * jax.lax.rsqrt(var + 1e-5) * g + beta


# ----------------------------- fused CLIP forward kernel -----------------------------

def make_clip_kernel(temperature: float, batch: int):
    inv_t = 1.0 / float(temperature)
    half_t = 0.5 * float(temperature)
    B = batch

    def clip_kernel(img_feat_ref, txt_feat_ref,
                    wi1_ref, bi1_ref, wi2_ref, bi2_ref, gi_ref, betai_ref,
                    wt1_ref, bt1_ref, wt2_ref, bt2_ref, gt_ref, betat_ref,
                    loss_ref, emb_ref):
        # ----- two projection heads (embeddings never round-trip through HBM) -----
        img_emb = _projection_head(img_feat_ref[...],
                                   wi1_ref[...], bi1_ref[...],
                                   wi2_ref[...], bi2_ref[...],
                                   gi_ref[...], betai_ref[...])
        txt_emb = _projection_head(txt_feat_ref[...],
                                   wt1_ref[...], bt1_ref[...],
                                   wt2_ref[...], bt2_ref[...],
                                   gt_ref[...], betat_ref[...])

        # ----- one fused Gram matmul replaces the three tiny similarity matmuls -----
        # Stage [txt_emb ; img_emb] as a (2B, P) bf16 VMEM slab, then G = E @ E.T in a single
        # MXU pass (contraction over the feature axis of both operands: no materialized
        # transpose before the MXU).
        emb_ref[:B, :] = txt_emb.astype(jnp.bfloat16)
        emb_ref[B:, :] = img_emb.astype(jnp.bfloat16)
        gram = jax.lax.dot_general(
            emb_ref[...], emb_ref[...],
            dimension_numbers=(((1,), (1,)), ((), ())),
            preferred_element_type=jnp.float32)                 # (2B, 2B) f32

        logits = gram[:B, B:] * inv_t                           # text @ image.T / T
        texts_similarity = gram[:B, :B]                         # text @ text.T
        images_similarity = gram[B:, B:]                        # image @ image.T

        # targets = softmax((img_sim + txt_sim) * T / 2, dim=-1)  (lane-wise reductions)
        s = (images_similarity + texts_similarity) * half_t
        s_max = jnp.max(s, axis=-1, keepdims=True)
        s_exp = jnp.exp(s - s_max)
        targets = s_exp / jnp.sum(s_exp, axis=-1, keepdims=True)

        # Row (lane) logsumexp of logits -> texts_loss log-softmax denominator.
        r_max = jnp.max(logits, axis=-1, keepdims=True)
        row_lse = r_max + jnp.log(jnp.sum(jnp.exp(logits - r_max), axis=-1, keepdims=True))

        # Column logsumexp of logits -> images_loss (logits.T) log-softmax denominator.
        # Kept as axis=0 (cross-sublane XLU) reductions per the review's fallback clause:
        # 2 reduces over a 16-vreg tile, and the XLU is not the binding slot in this kernel.
        c_max = jnp.max(logits, axis=0, keepdims=True)
        col_lse = c_max + jnp.log(jnp.sum(jnp.exp(logits - c_max), axis=0, keepdims=True))

        # loss.mean() = sum_ij -targets[i,j] * (ls_row[i,j] + ls_col[i,j]) / (2B)
        #             = -sum(targets * (2*logits - row_lse - col_lse)) / (2B)
        # Single fused elementwise chain (no (B,B) ls_row/ls_col temporaries); negation and
        # 1/(2B) are hoisted onto the final scalar.
        total = jnp.sum(targets * (2.0 * logits - row_lse - col_lse))
        loss_ref[0, 0] = total * (-1.0 / (2.0 * B))

    return clip_kernel


def clip_forward_fused(image_features, text_features, image_proj, text_proj, temperature=1.0):
    """Single gridless pallas_call: image head + text head + CLIP contrastive loss."""
    B, Ei = image_features.shape
    B2, Et = text_features.shape
    assert B == B2 and B % 8 == 0, "batch must be a multiple of 8 (128 preferred for full lanes)"
    P = image_proj[0].shape[1]

    def prep(params):
        # weights bf16 (half the DMA bytes, feeds the MXU directly);
        # biases / LayerNorm affine stay f32 and are pre-shaped to (1, P).
        w1, b1, w2, b2, g, beta = params
        return (w1.astype(jnp.bfloat16), b1.reshape(1, -1).astype(jnp.float32),
                w2.astype(jnp.bfloat16), b2.reshape(1, -1).astype(jnp.float32),
                g.reshape(1, -1).astype(jnp.float32), beta.reshape(1, -1).astype(jnp.float32))

    ip = prep(image_proj)
    tp = prep(text_proj)

    vmem = pl.BlockSpec(memory_space=pltpu.MemorySpace.VMEM)
    n_inputs = 2 + len(ip) + len(tp)

    out = pl.pallas_call(
        make_clip_kernel(float(temperature), B),
        out_shape=jax.ShapeDtypeStruct((1, 1), jnp.float32),
        in_specs=[vmem] * n_inputs,
        out_specs=pl.BlockSpec(memory_space=pltpu.MemorySpace.SMEM),
        scratch_shapes=[pltpu.VMEM((2 * B, P), jnp.bfloat16)],   # [txt_emb ; img_emb] staging
    )(image_features.astype(jnp.bfloat16), text_features.astype(jnp.bfloat16), *ip, *tp)
    return out[0, 0]


# ----------------------------- model glue (plain JAX) -----------------------------

def init_params(key, img_channels=3, vocab=64,
                image_embedding=256, text_embedding=128, projection_dim=128):
    # Feature / projection dims are multiples of 128 so every VMEM block is lane-dense
    # (full vreg lanes, unmasked stores) and the MXU sees >=128-wide N.
    def linear(k, fan_in, fan_out):
        kw, kb = jax.random.split(k)
        bound = 1.0 / jnp.sqrt(jnp.float32(fan_in))
        w = jax.random.uniform(kw, (fan_in, fan_out), jnp.float32, -bound, bound)
        b = jax.random.uniform(kb, (fan_out,), jnp.float32, -bound, bound)
        return w, b

    keys = jax.random.split(key, 6)
    w1_i, b1_i = linear(keys[0], image_embedding, projection_dim)
    w2_i, b2_i = linear(keys[1], projection_dim, projection_dim)
    w1_t, b1_t = linear(keys[2], text_embedding, projection_dim)
    w2_t, b2_t = linear(keys[3], projection_dim, projection_dim)
    return {
        # encoder stand-in params
        "img_enc_w": 0.1 * jax.random.normal(keys[4], (img_channels, image_embedding), jnp.float32),
        "tok_emb": 0.1 * jax.random.normal(keys[5], (vocab, text_embedding), jnp.float32),
        # projection heads: (w1, b1, w2, b2, ln_gamma, ln_beta)
        "image_projection": (w1_i, b1_i, w2_i, b2_i,
                             jnp.ones((projection_dim,), jnp.float32),
                             jnp.zeros((projection_dim,), jnp.float32)),
        "text_projection": (w1_t, b1_t, w2_t, b2_t,
                            jnp.ones((projection_dim,), jnp.float32),
                            jnp.zeros((projection_dim,), jnp.float32)),
    }


def clip_model_forward(params, batch, temperature=1.0):
    # TODO(synk): stand-in for timm ResNet-50 (global_pool='avg', num_classes=0):
    #             global average pool over H,W then a linear map to the image-embedding dim.
    image_features = jnp.mean(batch["image"], axis=(2, 3)) @ params["img_enc_w"]

    # TODO(synk): stand-in for DistilBERT; mirrors last_hidden_state[:, 0, :] by taking the
    #             token-0 embedding (attention_mask is accepted but unused in the stand-in).
    _ = batch["attention_mask"]
    text_features = params["tok_emb"][batch["input_ids"][:, 0]]

    return clip_forward_fused(image_features, text_features,
                              params["image_projection"], params["text_projection"],
                              temperature)


if __name__ == "__main__":
    key = jax.random.PRNGKey(0)
    k_img, k_ids, k_param = jax.random.split(key, 3)

    # B = 128 (= CFG.batch_size): fills full vreg lanes for the (B,B) logits and gives every
    # MXU dot M >= 128 (perf-review item #1). Other shapes kept small.
    B, C, H, W, L = 128, 3, 16, 16, 8
    batch = {
        "image": jax.random.normal(k_img, (B, C, H, W), jnp.float32),
        "input_ids": jax.random.randint(k_ids, (B, L), 0, 64),
        "attention_mask": jnp.ones((B, L), jnp.int32),
    }
    params = init_params(k_param)

    loss = clip_model_forward(params, batch, temperature=1.0)
    loss = jax.block_until_ready(loss)
    assert loss.shape == ()  # scalar mean loss
    print("KERNEL_OK")
</pallas_src>

<mosaic_0001>
module attributes {stable_mosaic.version = 11 : i64} {
  func.func @clip_kernel(%arg0: memref<128x256xbf16, #tpu.memory_space<vmem>>, %arg1: memref<128x128xbf16, #tpu.memory_space<vmem>>, %arg2: memref<256x128xbf16, #tpu.memory_space<vmem>>, %arg3: memref<1x128xf32, #tpu.memory_space<vmem>>, %arg4: memref<128x128xbf16, #tpu.memory_space<vmem>>, %arg5: memref<1x128xf32, #tpu.memory_space<vmem>>, %arg6: memref<1x128xf32, #tpu.memory_space<vmem>>, %arg7: memref<1x128xf32, #tpu.memory_space<vmem>>, %arg8: memref<128x128xbf16, #tpu.memory_space<vmem>>, %arg9: memref<1x128xf32, #tpu.memory_space<vmem>>, %arg10: memref<128x128xbf16, #tpu.memory_space<vmem>>, %arg11: memref<1x128xf32, #tpu.memory_space<vmem>>, %arg12: memref<1x128xf32, #tpu.memory_space<vmem>>, %arg13: memref<1x128xf32, #tpu.memory_space<vmem>>, %arg14: memref<1x1xf32, #tpu.memory_space<smem>>, %arg15: memref<256x128xbf16, #tpu.memory_space<vmem>>) attributes {dimension_semantics = [], scalar_prefetch = 0 : i64, scratch_operands = 1 : i64, tpu.core_type = #tpu.core_type<tc>} {
    %c0 = arith.constant 0 : index
    %c0_0 = arith.constant 0 : index
    %0 = vector.load %arg0[%c0, %c0_0] : memref<128x256xbf16, #tpu.memory_space<vmem>>, vector<128x256xbf16>
    %c0_1 = arith.constant 0 : index
    %c0_2 = arith.constant 0 : index
    %1 = vector.load %arg2[%c0_1, %c0_2] : memref<256x128xbf16, #tpu.memory_space<vmem>>, vector<256x128xbf16>
    %c0_3 = arith.constant 0 : index
    %c0_4 = arith.constant 0 : index
    %2 = vector.load %arg3[%c0_3, %c0_4] : memref<1x128xf32, #tpu.memory_space<vmem>>, vector<1x128xf32>
    %c0_5 = arith.constant 0 : index
    %c0_6 = arith.constant 0 : index
    %3 = vector.load %arg4[%c0_5, %c0_6] : memref<128x128xbf16, #tpu.memory_space<vmem>>, vector<128x128xbf16>
    %c0_7 = arith.constant 0 : index
    %c0_8 = arith.constant 0 : index
    %4 = vector.load %arg5[%c0_7, %c0_8] : memref<1x128xf32, #tpu.memory_space<vmem>>, vector<1x128xf32>
    %c0_9 = arith.constant 0 : index
    %c0_10 = arith.constant 0 : index
    %5 = vector.load %arg6[%c0_9, %c0_10] : memref<1x128xf32, #tpu.memory_space<vmem>>, vector<1x128xf32>
    %c0_11 = arith.constant 0 : index
    %c0_12 = arith.constant 0 : index
    %6 = vector.load %arg7[%c0_11, %c0_12] : memref<1x128xf32, #tpu.memory_space<vmem>>, vector<1x128xf32>
    %cst = arith.constant dense<0.000000e+00> : vector<128x128xf32>
    %7 = tpu.matmul %0, %1, %cst {dimension_numbers = #tpu.dot_dimension_numbers<[1], [0], [0], [1], [0, 0, 1, 1], [], []>} : vector<128x256xbf16>, vector<256x128xbf16>, vector<128x128xf32> -> vector<128x128xf32>
    %8 = vector.broadcast %2 : vector<1x128xf32> to vector<128x128xf32>
    %9 = arith.addf %7, %8 : vector<128x128xf32>
    %10 = arith.mulf %9, %9 : vector<128x128xf32>
    %11 = arith.mulf %9, %10 : vector<128x128xf32>
    %cst_13 = arith.constant 4.471500e-02 : f32
    %12 = vector.broadcast %cst_13 : f32 to vector<128x128xf32>
    %13 = arith.mulf %12, %11 : vector<128x128xf32>
    %14 = arith.addf %9, %13 : vector<128x128xf32>
    %cst_14 = arith.constant 0.797884583 : f32
    %15 = vector.broadcast %cst_14 : f32 to vector<128x128xf32>
    %16 = arith.mulf %15, %14 : vector<128x128xf32>
    %17 = math.tanh %16 : vector<128x128xf32>
    %cst_15 = arith.constant 1.000000e+00 : f32
    %18 = vector.broadcast %cst_15 : f32 to vector<128x128xf32>
    %19 = arith.addf %18, %17 : vector<128x128xf32>
    %cst_16 = arith.constant 5.000000e-01 : f32
    %20 = vector.broadcast %cst_16 : f32 to vector<128x128xf32>
    %21 = arith.mulf %20, %19 : vector<128x128xf32>
    %22 = arith.mulf %9, %21 : vector<128x128xf32>
    %23 = arith.truncf %22 : vector<128x128xf32> to vector<128x128xbf16>
    %cst_17 = arith.constant dense<0.000000e+00> : vector<128x128xf32>
    %24 = tpu.matmul %23, %3, %cst_17 {dimension_numbers = #tpu.dot_dimension_numbers<[1], [0], [0], [1], [0, 0, 1, 1], [], []>} : vector<128x128xbf16>, vector<128x128xbf16>, vector<128x128xf32> -> vector<128x128xf32>
    %25 = vector.broadcast %4 : vector<1x128xf32> to vector<128x128xf32>
    %26 = arith.addf %24, %25 : vector<128x128xf32>
    %27 = arith.addf %26, %9 : vector<128x128xf32>
    %cst_18 = arith.constant dense<0.000000e+00> : vector<128xf32>
    %28 = vector.multi_reduction <add>, %27, %cst_18 [1] : vector<128x128xf32> to vector<128xf32>
    %29 = vector.shape_cast %28 : vector<128xf32> to vector<128x1xf32>
    %cst_19 = arith.constant 1.280000e+02 : f32
    %30 = vector.broadcast %cst_19 : f32 to vector<128x1xf32>
    %31 = arith.divf %29, %30 : vector<128x1xf32>
    %32 = vector.broadcast %31 : vector<128x1xf32> to vector<128x128xf32>
    %33 = arith.subf %27, %32 : vector<128x128xf32>
    %34 = arith.mulf %33, %33 : vector<128x128xf32>
    %cst_20 = arith.constant dense<0.000000e+00> : vector<128xf32>
    %35 = vector.multi_reduction <add>, %34, %cst_20 [1] : vector<128x128xf32> to vector<128xf32>
    %36 = vector.shape_cast %35 : vector<128xf32> to vector<128x1xf32>
    %cst_21 = arith.constant 1.280000e+02 : f32
    %37 = vector.broadcast %cst_21 : f32 to vector<128x1xf32>
    %38 = arith.divf %36, %37 : vector<128x1xf32>
    %39 = vector.broadcast %31 : vector<128x1xf32> to vector<128x128xf32>
    %40 = arith.subf %27, %39 : vector<128x128xf32>
    %cst_22 = arith.constant 9.99999974E-6 : f32
    %41 = vector.broadcast %cst_22 : f32 to vector<128x1xf32>
    %42 = arith.addf %38, %41 : vector<128x1xf32>
    %43 = math.rsqrt %42 : vector<128x1xf32>
    %44 = vector.broadcast %43 : vector<128x1xf32> to vector<128x128xf32>
    %45 = arith.mulf %40, %44 : vector<128x128xf32>
    %46 = vector.broadcast %5 : vector<1x128xf32> to vector<128x128xf32>
    %47 = arith.mulf %45, %46 : vector<128x128xf32>
    %48 = vector.broadcast %6 : vector<1x128xf32> to vector<128x128xf32>
    %49 = arith.addf %47, %48 : vector<128x128xf32>
    %c0_23 = arith.constant 0 : index
    %c0_24 = arith.constant 0 : index
    %50 = vector.load %arg1[%c0_23, %c0_24] : memref<128x128xbf16, #tpu.memory_space<vmem>>, vector<128x128xbf16>
    %c0_25 = arith.constant 0 : index
    %c0_26 = arith.constant 0 : index
    %51 = vector.load %arg8[%c0_25, %c0_26] : memref<128x128xbf16, #tpu.memory_space<vmem>>, vector<128x128xbf16>
    %c0_27 = arith.constant 0 : index
    %c0_28 = arith.constant 0 : index
    %52 = vector.load %arg9[%c0_27, %c0_28] : memref<1x128xf32, #tpu.memory_space<vmem>>, vector<1x128xf32>
    %c0_29 = arith.constant 0 : index
    %c0_30 = arith.constant 0 : index
    %53 = vector.load %arg10[%c0_29, %c0_30] : memref<128x128xbf16, #tpu.memory_space<vmem>>, vector<128x128xbf16>
    %c0_31 = arith.constant 0 : index
    %c0_32 = arith.constant 0 : index
    %54 = vector.load %arg11[%c0_31, %c0_32] : memref<1x128xf32, #tpu.memory_space<vmem>>, vector<1x128xf32>
    %c0_33 = arith.constant 0 : index
    %c0_34 = arith.constant 0 : index
    %55 = vector.load %arg12[%c0_33, %c0_34] : memref<1x128xf32, #tpu.memory_space<vmem>>, vector<1x128xf32>
    %c0_35 = arith.constant 0 : index
    %c0_36 = arith.constant 0 : index
    %56 = vector.load %arg13[%c0_35, %c0_36] : memref<1x128xf32, #tpu.memory_space<vmem>>, vector<1x128xf32>
    %cst_37 = arith.constant dense<0.000000e+00> : vector<128x128xf32>
    %57 = tpu.matmul %50, %51, %cst_37 {dimension_numbers = #tpu.dot_dimension_numbers<[1], [0], [0], [1], [0, 0, 1, 1], [], []>} : vector<128x128xbf16>, vector<128x128xbf16>, vector<128x128xf32> -> vector<128x128xf32>
    %58 = vector.broadcast %52 : vector<1x128xf32> to vector<128x128xf32>
    %59 = arith.addf %57, %58 : vector<128x128xf32>
    %60 = arith.mulf %59, %59 : vector<128x128xf32>
    %61 = arith.mulf %59, %60 : vector<128x128xf32>
    %cst_38 = arith.constant 4.471500e-02 : f32
    %62 = vector.broadcast %cst_38 : f32 to vector<128x128xf32>
    %63 = arith.mulf %62, %61 : vector<128x128xf32>
    %64 = arith.addf %59, %63 : vector<128x128xf32>
    %cst_39 = arith.constant 0.797884583 : f32
    %65 = vector.broadcast %cst_39 : f32 to vector<128x128xf32>
    %66 = arith.mulf %65, %64 : vector<128x128xf32>
    %67 = math.tanh %66 : vector<128x128xf32>
    %cst_40 = arith.constant 1.000000e+00 : f32
    %68 = vector.broadcast %cst_40 : f32 to vector<128x128xf32>
    %69 = arith.addf %68, %67 : vector<128x128xf32>
    %cst_41 = arith.constant 5.000000e-01 : f32
    %70 = vector.broadcast %cst_41 : f32 to vector<128x128xf32>
    %71 = arith.mulf %70, %69 : vector<128x128xf32>
    %72 = arith.mulf %59, %71 : vector<128x128xf32>
    %73 = arith.truncf %72 : vector<128x128xf32> to vector<128x128xbf16>
    %cst_42 = arith.constant dense<0.000000e+00> : vector<128x128xf32>
    %74 = tpu.matmul %73, %53, %cst_42 {dimension_numbers = #tpu.dot_dimension_numbers<[1], [0], [0], [1], [0, 0, 1, 1], [], []>} : vector<128x128xbf16>, vector<128x128xbf16>, vector<128x128xf32> -> vector<128x128xf32>
    %75 = vector.broadcast %54 : vector<1x128xf32> to vector<128x128xf32>
    %76 = arith.addf %74, %75 : vector<128x128xf32>
    %77 = arith.addf %76, %59 : vector<128x128xf32>
    %cst_43 = arith.constant dense<0.000000e+00> : vector<128xf32>
    %78 = vector.multi_reduction <add>, %77, %cst_43 [1] : vector<128x128xf32> to vector<128xf32>
    %79 = vector.shape_cast %78 : vector<128xf32> to vector<128x1xf32>
    %cst_44 = arith.constant 1.280000e+02 : f32
    %80 = vector.broadcast %cst_44 : f32 to vector<128x1xf32>
    %81 = arith.divf %79, %80 : vector<128x1xf32>
    %82 = vector.broadcast %81 : vector<128x1xf32> to vector<128x128xf32>
    %83 = arith.subf %77, %82 : vector<128x128xf32>
    %84 = arith.mulf %83, %83 : vector<128x128xf32>
    %cst_45 = arith.constant dense<0.000000e+00> : vector<128xf32>
    %85 = vector.multi_reduction <add>, %84, %cst_45 [1] : vector<128x128xf32> to vector<128xf32>
    %86 = vector.shape_cast %85 : vector<128xf32> to vector<128x1xf32>
    %cst_46 = arith.constant 1.280000e+02 : f32
    %87 = vector.broadcast %cst_46 : f32 to vector<128x1xf32>
    %88 = arith.divf %86, %87 : vector<128x1xf32>
    %89 = vector.broadcast %81 : vector<128x1xf32> to vector<128x128xf32>
    %90 = arith.subf %77, %89 : vector<128x128xf32>
    %cst_47 = arith.constant 9.99999974E-6 : f32
    %91 = vector.broadcast %cst_47 : f32 to vector<128x1xf32>
    %92 = arith.addf %88, %91 : vector<128x1xf32>
    %93 = math.rsqrt %92 : vector<128x1xf32>
    %94 = vector.broadcast %93 : vector<128x1xf32> to vector<128x128xf32>
    %95 = arith.mulf %90, %94 : vector<128x128xf32>
    %96 = vector.broadcast %55 : vector<1x128xf32> to vector<128x128xf32>
    %97 = arith.mulf %95, %96 : vector<128x128xf32>
    %98 = vector.broadcast %56 : vector<1x128xf32> to vector<128x128xf32>
    %99 = arith.addf %97, %98 : vector<128x128xf32>
    %100 = arith.truncf %99 : vector<128x128xf32> to vector<128x128xbf16>
    %c0_48 = arith.constant 0 : index
    %c0_49 = arith.constant 0 : index
    %101 = vector.load %arg15[%c0_48, %c0_49] : memref<256x128xbf16, #tpu.memory_space<vmem>>, vector<128x128xbf16>
    tpu.vector_store %arg15[%c0_48, %c0_49], %100 {strides = array<i32>} : memref<256x128xbf16, #tpu.memory_space<vmem>>, vector<128x128xbf16>,
    %102 = arith.truncf %49 : vector<128x128xf32> to vector<128x128xbf16>
    %c128 = arith.constant 128 : index
    %c0_50 = arith.constant 0 : index
    %103 = vector.load %arg15[%c128, %c0_50] : memref<256x128xbf16, #tpu.memory_space<vmem>>, vector<128x128xbf16>
    tpu.vector_store %arg15[%c128, %c0_50], %102 {strides = array<i32>} : memref<256x128xbf16, #tpu.memory_space<vmem>>, vector<128x128xbf16>,
    %c0_51 = arith.constant 0 : index
    %c0_52 = arith.constant 0 : index
    %104 = vector.load %arg15[%c0_51, %c0_52] : memref<256x128xbf16, #tpu.memory_space<vmem>>, vector<256x128xbf16>
    %c0_53 = arith.constant 0 : index
    %c0_54 = arith.constant 0 : index
    %105 = vector.load %arg15[%c0_53, %c0_54] : memref<256x128xbf16, #tpu.memory_space<vmem>>, vector<256x128xbf16>
    %cst_55 = arith.constant dense<0.000000e+00> : vector<256x256xf32>
    %106 = tpu.matmul %104, %105, %cst_55 {dimension_numbers = #tpu.dot_dimension_numbers<[1], [1], [0], [0], [0, 0, 1, 0], [], []>} : vector<256x128xbf16>, vector<256x128xbf16>, vector<256x256xf32> -> vector<256x256xf32>
    %107 = vector.extract_strided_slice %106 {offsets = [0, 128], sizes = [128, 128], strides = [1, 1]} : vector<256x256xf32> to vector<128x128xf32>
    %cst_56 = arith.constant 1.000000e+00 : f32
    %108 = vector.broadcast %cst_56 : f32 to vector<128x128xf32>
    %109 = arith.mulf %107, %108 : vector<128x128xf32>
    %110 = vector.extract_strided_slice %106 {offsets = [0, 0], sizes = [128, 128], strides = [1, 1]} : vector<256x256xf32> to vector<128x128xf32>
    %111 = vector.extract_strided_slice %106 {offsets = [128, 128], sizes = [128, 128], strides = [1, 1]} : vector<256x256xf32> to vector<128x128xf32>
    %112 = arith.addf %111, %110 : vector<128x128xf32>
    %cst_57 = arith.constant 5.000000e-01 : f32
    %113 = vector.broadcast %cst_57 : f32 to vector<128x128xf32>
    %114 = arith.mulf %112, %113 : vector<128x128xf32>
    %cst_58 = arith.constant dense<0xFF800000> : vector<128xf32>
    %115 = vector.multi_reduction <maximumf>, %114, %cst_58 [1] : vector<128x128xf32> to vector<128xf32>
    %116 = vector.shape_cast %115 : vector<128xf32> to vector<128x1xf32>
    %117 = vector.broadcast %116 : vector<128x1xf32> to vector<128x128xf32>
    %118 = arith.subf %114, %117 : vector<128x128xf32>
    %119 = math.exp %118 : vector<128x128xf32>
    %cst_59 = arith.constant dense<0.000000e+00> : vector<128xf32>
    %120 = vector.multi_reduction <add>, %119, %cst_59 [1] : vector<128x128xf32> to vector<128xf32>
    %121 = vector.shape_cast %120 : vector<128xf32> to vector<128x1xf32>
    %122 = vector.broadcast %121 : vector<128x1xf32> to vector<128x128xf32>
    %123 = arith.divf %119, %122 : vector<128x128xf32>
    %cst_60 = arith.constant dense<0xFF800000> : vector<128xf32>
    %124 = vector.multi_reduction <maximumf>, %109, %cst_60 [1] : vector<128x128xf32> to vector<128xf32>
    %125 = vector.shape_cast %124 : vector<128xf32> to vector<128x1xf32>
    %126 = vector.broadcast %125 : vector<128x1xf32> to vector<128x128xf32>
    %127 = arith.subf %109, %126 : vector<128x128xf32>
    %128 = math.exp %127 : vector<128x128xf32>
    %cst_61 = arith.constant dense<0.000000e+00> : vector<128xf32>
    %129 = vector.multi_reduction <add>, %128, %cst_61 [1] : vector<128x128xf32> to vector<128xf32>
    %130 = vector.shape_cast %129 : vector<128xf32> to vector<128x1xf32>
    %131 = math.log %130 : vector<128x1xf32>
    %132 = arith.addf %125, %131 : vector<128x1xf32>
    %cst_62 = arith.constant dense<0xFF800000> : vector<128xf32>
    %133 = vector.multi_reduction <maximumf>, %109, %cst_62 [0] : vector<128x128xf32> to vector<128xf32>
    %134 = vector.shape_cast %133 : vector<128xf32> to vector<1x128xf32>
    %135 = vector.broadcast %134 : vector<1x128xf32> to vector<128x128xf32>
    %136 = arith.subf %109, %135 : vector<128x128xf32>
    %137 = math.exp %136 : vector<128x128xf32>
    %cst_63 = arith.constant dense<0.000000e+00> : vector<128xf32>
    %138 = vector.multi_reduction <add>, %137, %cst_63 [0] : vector<128x128xf32> to vector<128xf32>
    %139 = vector.shape_cast %138 : vector<128xf32> to vector<1x128xf32>
    %140 = math.log %139 : vector<1x128xf32>
    %141 = arith.addf %134, %140 : vector<1x128xf32>
    %cst_64 = arith.constant 2.000000e+00 : f32
    %142 = vector.broadcast %cst_64 : f32 to vector<128x128xf32>
    %143 = arith.mulf %142, %109 : vector<128x128xf32>
    %144 = vector.broadcast %132 : vector<128x1xf32> to vector<128x128xf32>
    %145 = arith.subf %143, %144 : vector<128x128xf32>
    %146 = vector.broadcast %141 : vector<1x128xf32> to vector<128x128xf32>
    %147 = arith.subf %145, %146 : vector<128x128xf32>
    %148 = arith.mulf %123, %147 : vector<128x128xf32>
    %149 = vector.shape_cast %148 : vector<128x128xf32> to vector<1x128x128xf32>
    %cst_65 = arith.constant dense<0.000000e+00> : vector<1xf32>
    %150 = vector.multi_reduction <add>, %149, %cst_65 [1, 2] : vector<1x128x128xf32> to vector<1xf32>
    %151 = vector.shape_cast %150 : vector<1xf32> to vector<1x1x1xf32>
    %152 = vector.extract %151[0, 0, 0] : f32 from vector<1x1x1xf32>
    %cst_66 = arith.constant -3.906250e-03 : f32
    %153 = arith.mulf %152, %cst_66 : f32
    %c0_67 = arith.constant 0 : index
    %c0_68 = arith.constant 0 : index
    %154 = memref.load %arg14[%c0_67, %c0_68] : memref<1x1xf32, #tpu.memory_space<smem>>
    memref.store %153, %arg14[%c0_67, %c0_68] : memref<1x1xf32, #tpu.memory_space<smem>>
    return
  }
}

</mosaic_0001>

<llo_original>
// kernel: tpu_custom_call.1
$region0: #{tpu_custom_call.1}
  #allocation0 [shape = 'u32[]', space=smem, size = 0x4, offset = 0x4, fixed_abs, tag = 'smem constant byte address 0x4 - core index']
  #allocation1 [shape = 'u32[144,128]{1,0:T(1,128)}', space=vmem, size = 0x12000, scoped, tag = 'internal scratch']
  #allocation2 [shape = 'bf16[256,128]{1,0:T(16,128)(2,1)}', space=vmem, size = 0x10000, scoped, tag = 'scratch operand']
  %s0 = inlined_call_operand.hbm [shape: bf16[128,256], index: 0, kind: input, shape index: {}]
  %s1 = inlined_call_operand.hbm [shape: bf16[128,128], index: 1, kind: input, shape index: {}]
  %s2 = inlined_call_operand.hbm [shape: bf16[256,128], index: 2, kind: input, shape index: {}]
  %s3 = inlined_call_operand.vmem [shape: f32[1,128], index: 3, kind: input, shape index: {}]
  %s4 = inlined_call_operand.hbm [shape: bf16[128,128], index: 4, kind: input, shape index: {}]
  %s5 = inlined_call_operand.vmem [shape: f32[1,128], index: 5, kind: input, shape index: {}]
  %s6 = inlined_call_operand.vmem [shape: f32[1,128], index: 6, kind: input, shape index: {}]
  %s7 = inlined_call_operand.vmem [shape: f32[1,128], index: 7, kind: input, shape index: {}]
  %s8 = inlined_call_operand.hbm [shape: bf16[128,128], index: 8, kind: input, shape index: {}]
  %s9 = inlined_call_operand.vmem [shape: f32[1,128], index: 9, kind: input, shape index: {}]
  %s10 = inlined_call_operand.hbm [shape: bf16[128,128], index: 10, kind: input, shape index: {}]
  %s11 = inlined_call_operand.vmem [shape: f32[1,128], index: 11, kind: input, shape index: {}]
  %s12 = inlined_call_operand.vmem [shape: f32[1,128], index: 12, kind: input, shape index: {}]
  %s13 = inlined_call_operand.vmem [shape: f32[1,128], index: 13, kind: input, shape index: {}]
  %s14 = inlined_call_operand.hbm [shape: f32[1,1], index: 14, kind: output, shape index: {}]
  %s15 = sld [smem:[#allocation0]]
  $region90: #{tpu_custom_call.1} parent=0
    _
  %s17 = ssub.s32 1, %s15
  %s18 = scalar_select 0, %s17, %s15
  $region1: #{tpu_custom_call.1} parent=0
    #allocation3 [shape = 'u8[65536]{0}', space=vmem, size = 0x10000, scoped, tag = 'input window, operand 0, single buffered']
    #allocation4 [shape = 's32[1]{0}', space=sflag, size = 0x4, scoped, tag = 'scoped memory for tpu_custom_call.1']
    #allocation5 [shape = 's32[1]{0}', space=sflag, size = 0x4, scoped, tag = 'scoped memory for tpu_custom_call.1']
    #allocation6 [shape = 'u8[32768]{0}', space=vmem, size = 0x8000, scoped, tag = 'input window, operand 1, single buffered']
    #allocation7 [shape = 's32[1]{0}', space=sflag, size = 0x4, scoped, tag = 'scoped memory for tpu_custom_call.1']
    #allocation8 [shape = 'u8[65536]{0}', space=vmem, size = 0x10000, scoped, tag = 'input window, operand 2, single buffered']
    #allocation9 [shape = 'u8[32768]{0}', space=vmem, size = 0x8000, scoped, tag = 'input window, operand 4, single buffered']
    #allocation10 [shape = 's32[1]{0}', space=sflag, size = 0x4, scoped, tag = 'scoped memory for tpu_custom_call.1']
    #allocation11 [shape = 'u8[32768]{0}', space=vmem, size = 0x8000, scoped, tag = 'input window, operand 8, single buffered']
    #allocation12 [shape = 'u8[32768]{0}', space=vmem, size = 0x8000, scoped, tag = 'input window, operand 10, single buffered']
    #allocation13 [shape = 's32[1]{0}', space=sflag, size = 0x4, scoped, tag = 'scoped memory for tpu_custom_call.1']
    #allocation14 [shape = 'u8[512]{0}', space=smem, size = 0x200, scoped, tag = 'output window, operand 0, single buffered']
    %19 = vsyncpa [#allocation4], 0
    %20 = vsyncpa [#allocation7], 0
    %21 = vsyncpa [#allocation10], 0
    %22 = vsyncpa [#allocation13], 0
    %23 = vsyncpa [#allocation5], 0
    // Predicated region
    $region2: #{tpu_custom_call.1} parent=1 // pred_check
      _
    $region3: #{tpu_custom_call.1} parent=1 // pred_check_branch
      %25 = sbr.rel (0) target = $region5
    $region4: #{tpu_custom_call.1} parent=1 // pred_region
      %s27 = ssub.s32 2048, 2048
      %28 = vsyncadd [#allocation4], %s27
      %s29 = sshll.u32 [#allocation3], 4
      %s30 = int_to_ptr.vmem [resolvable:$true] %s29
      %35 = dma.hbm_to_vmem [thread:$0]  %s0, 2048, %s30, [#allocation4], 128, 128, 8
    $region5: #{tpu_custom_call.1} parent=1 // pred_fallthru
      _
    // Predicated region
    $region6: #{tpu_custom_call.1} parent=1 // pred_check
      _
    $region7: #{tpu_custom_call.1} parent=1 // pred_check_branch
      %37 = sbr.rel (0) target = $region9
    $region8: #{tpu_custom_call.1} parent=1 // pred_region
      %s39 = ssub.s32 1024, 1024
      %40 = vsyncadd [#allocation7], %s39
      %s41 = sshll.u32 [#allocation6], 4
      %s42 = int_to_ptr.vmem [resolvable:$true] %s41
      %47 = dma.hbm_to_vmem [thread:$0]  %s1, 1024, %s42, [#allocation7], 64, 64, 4
    $region9: #{tpu_custom_call.1} parent=1 // pred_fallthru
      _
    // Predicated region
    $region10: #{tpu_custom_call.1} parent=1 // pred_check
      _
    $region11: #{tpu_custom_call.1} parent=1 // pred_check_branch
      %49 = sbr.rel (0) target = $region13
    $region12: #{tpu_custom_call.1} parent=1 // pred_region
      %s51 = ssub.s32 2048, 2048
      %52 = vsyncadd [#allocation7], %s51
      %s53 = sshll.u32 [#allocation8], 4
      %s54 = int_to_ptr.vmem [resolvable:$true] %s53
      %59 = dma.hbm_to_vmem [thread:$0]  %s2, 2048, %s54, [#allocation7], 64, 64, 4
    $region13: #{tpu_custom_call.1} parent=1 // pred_fallthru
      _
    // Predicated region
    $region14: #{tpu_custom_call.1} parent=1 // pred_check
      _
    $region15: #{tpu_custom_call.1} parent=1 // pred_check_branch
      %61 = sbr.rel (0) target = $region17
    $region16: #{tpu_custom_call.1} parent=1 // pred_region
      _
    $region17: #{tpu_custom_call.1} parent=1 // pred_fallthru
      _
    // Predicated region
    $region18: #{tpu_custom_call.1} parent=1 // pred_check
      _
    $region19: #{tpu_custom_call.1} parent=1 // pred_check_branch
      %63 = sbr.rel (0) target = $region21
    $region20: #{tpu_custom_call.1} parent=1 // pred_region
      %s65 = ssub.s32 1024, 1024
      %66 = vsyncadd [#allocation10], %s65
      %s67 = sshll.u32 [#allocation9], 4
      %s68 = int_to_ptr.vmem [resolvable:$true] %s67
      %73 = dma.hbm_to_vmem [thread:$0]  %s4, 1024, %s68, [#allocation10], 64, 64, 4
    $region21: #{tpu_custom_call.1} parent=1 // pred_fallthru
      _
    // Predicated region
    $region22: #{tpu_custom_call.1} parent=1 // pred_check
      _
    $region23: #{tpu_custom_call.1} parent=1 // pred_check_branch
      %75 = sbr.rel (0) target = $region25
    $region24: #{tpu_custom_call.1} parent=1 // pred_region
      _
    $region25: #{tpu_custom_call.1} parent=1 // pred_fallthru
      _
    // Predicated region
    $region26: #{tpu_custom_call.1} parent=1 // pred_check
      _
    $region27: #{tpu_custom_call.1} parent=1 // pred_check_branch
      %77 = sbr.rel (0) target = $region29
    $region28: #{tpu_custom_call.1} parent=1 // pred_region
      _
    $region29: #{tpu_custom_call.1} parent=1 // pred_fallthru
      _
    // Predicated region
    $region30: #{tpu_custom_call.1} parent=1 // pred_check
      _
    $region31: #{tpu_custom_call.1} parent=1 // pred_check_branch
      %79 = sbr.rel (0) target = $region33
    $region32: #{tpu_custom_call.1} parent=1 // pred_region
      _
    $region33: #{tpu_custom_call.1} parent=1 // pred_fallthru
      _
    // Predicated region
    $region34: #{tpu_custom_call.1} parent=1 // pred_check
      _
    $region35: #{tpu_custom_call.1} parent=1 // pred_check_branch
      %81 = sbr.rel (0) target = $region37
    $region36: #{tpu_custom_call.1} parent=1 // pred_region
      %s83 = ssub.s32 1024, 1024
      %84 = vsyncadd [#allocation10], %s83
      %s85 = sshll.u32 [#allocation11], 4
      %s86 = int_to_ptr.vmem [resolvable:$true] %s85
      %91 = dma.hbm_to_vmem [thread:$0]  %s8, 1024, %s86, [#allocation10], 64, 64, 4
    $region37: #{tpu_custom_call.1} parent=1 // pred_fallthru
      _
    // Predicated region
    $region38: #{tpu_custom_call.1} parent=1 // pred_check
      _
    $region39: #{tpu_custom_call.1} parent=1 // pred_check_branch
      %93 = sbr.rel (0) target = $region41
    $region40: #{tpu_custom_call.1} parent=1 // pred_region
      _
    $region41: #{tpu_custom_call.1} parent=1 // pred_fallthru
      _
    // Predicated region
    $region42: #{tpu_custom_call.1} parent=1 // pred_check
      _
    $region43: #{tpu_custom_call.1} parent=1 // pred_check_branch
      %95 = sbr.rel (0) target = $region45
    $region44: #{tpu_custom_call.1} parent=1 // pred_region
      %s97 = ssub.s32 1024, 1024
      %98 = vsyncadd [#allocation13], %s97
      %s99 = sshll.u32 [#allocation12], 4
      %s100 = int_to_ptr.vmem [resolvable:$true] %s99
      %105 = dma.hbm_to_vmem [thread:$0]  %s10, 1024, %s100, [#allocation13], 64, 64, 4
    $region45: #{tpu_custom_call.1} parent=1 // pred_fallthru
      _
    // Predicated region
    $region46: #{tpu_custom_call.1} parent=1 // pred_check
      _
    $region47: #{tpu_custom_call.1} parent=1 // pred_check_branch
      %107 = sbr.rel (0) target = $region49
    $region48: #{tpu_custom_call.1} parent=1 // pred_region
      _
    $region49: #{tpu_custom_call.1} parent=1 // pred_fallthru
      _
    // Predicated region
    $region50: #{tpu_custom_call.1} parent=1 // pred_check
      _
    $region51: #{tpu_custom_call.1} parent=1 // pred_check_branch
      %109 = sbr.rel (0) target = $region53
    $region52: #{tpu_custom_call.1} parent=1 // pred_region
      _
    $region53: #{tpu_custom_call.1} parent=1 // pred_fallthru
      _
    // Predicated region
    $region54: #{tpu_custom_call.1} parent=1 // pred_check
      _
    $region55: #{tpu_custom_call.1} parent=1 // pred_check_branch
      %111 = sbr.rel (0) target = $region57
    $region56: #{tpu_custom_call.1} parent=1 // pred_region
      _
    $region57: #{tpu_custom_call.1} parent=1 // pred_fallthru
      _
    // Predicated region
    $region58: #{tpu_custom_call.1} parent=1 // pred_check
      _
    $region59: #{tpu_custom_call.1} parent=1 // pred_check_branch
      %113 = sbr.rel (0) target = $region61
    $region60: #{tpu_custom_call.1} parent=1 // pred_region
      %114 = dma.done [#allocation4], 2048
    $region61: #{tpu_custom_call.1} parent=1 // pred_fallthru
      _
    // Predicated region
    $region62: #{tpu_custom_call.1} parent=1 // pred_check
      _
    $region63: #{tpu_custom_call.1} parent=1 // pred_check_branch
      %116 = sbr.rel (0) target = $region65
    $region64: #{tpu_custom_call.1} parent=1 // pred_region
      %117 = dma.done [#allocation7], 1024
    $region65: #{tpu_custom_call.1} parent=1 // pred_fallthru
      _
    // Predicated region
    $region66: #{tpu_custom_call.1} parent=1 // pred_check
      _
    $region67: #{tpu_custom_call.1} parent=1 // pred_check_branch
      %119 = sbr.rel (0) target = $region69
    $region68: #{tpu_custom_call.1} parent=1 // pred_region
      %120 = dma.done [#allocation7], 2048
    $region69: #{tpu_custom_call.1} parent=1 // pred_fallthru
      _
    // Predicated region
    $region70: #{tpu_custom_call.1} parent=1 // pred_check
      _
    $region71: #{tpu_custom_call.1} parent=1 // pred_check_branch
      %122 = sbr.rel (0) target = $region73
    $region72: #{tpu_custom_call.1} parent=1 // pred_region
      %123 = dma.done [#allocation10], 1024
    $region73: #{tpu_custom_call.1} parent=1 // pred_fallthru
      _
    // Predicated region
    $region74: #{tpu_custom_call.1} parent=1 // pred_check
      _
    $region75: #{tpu_custom_call.1} parent=1 // pred_check_branch
      %125 = sbr.rel (0) target = $region77
    $region76: #{tpu_custom_call.1} parent=1 // pred_region
      %126 = dma.done [#allocation10], 1024
    $region77: #{tpu_custom_call.1} parent=1 // pred_fallthru
      _
    // Predicated region
    $region78: #{tpu_custom_call.1} parent=1 // pred_check
      _
    $region79: #{tpu_custom_call.1} parent=1 // pred_check_branch
      %128 = sbr.rel (0) target = $region81
    $region80: #{tpu_custom_call.1} parent=1 // pred_region
      %129 = dma.done [#allocation13], 1024
    $region81: #{tpu_custom_call.1} parent=1 // pred_fallthru
      _
    %v131 = vld [vmem:[#allocation3] sm:$0xff]
    %v132 = vld [vmem:[#allocation3 + $0x8] sm:$0xff]
    %v133 = vld [vmem:[#allocation3 + $0x10] sm:$0xff]
    %v134 = vld [vmem:[#allocation3 + $0x18] sm:$0xff]
    %v135 = vld [vmem:[#allocation3 + $0x20] sm:$0xff]
    %v136 = vld [vmem:[#allocation3 + $0x28] sm:$0xff]
    %v137 = vld [vmem:[#allocation3 + $0x30] sm:$0xff]
    %v138 = vld [vmem:[#allocation3 + $0x38] sm:$0xff]
    %v139 = vld [vmem:[#allocation3 + $0x40] sm:$0xff]
    %v140 = vld [vmem:[#allocation3 + $0x48] sm:$0xff]
    %v141 = vld [vmem:[#allocation3 + $0x50] sm:$0xff]
    %v142 = vld [vmem:[#allocation3 + $0x58] sm:$0xff]
    %v143 = vld [vmem:[#allocation3 + $0x60] sm:$0xff]
    %v144 = vld [vmem:[#allocation3 + $0x68] sm:$0xff]
    %v145 = vld [vmem:[#allocation3 + $0x70] sm:$0xff]
    %v146 = vld [vmem:[#allocation3 + $0x78] sm:$0xff]
    %v147 = vld [vmem:[#allocation8] sm:$0xf]
    %v148 = vld [vmem:[#allocation8 + $0x4] sm:$0xf]
    %v149 = vld [vmem:[#allocation8 + $0x8] sm:$0xf]
    %v150 = vld [vmem:[#allocation8 + $0xc] sm:$0xf]
    %v151 = vld [vmem:[#allocation8 + $0x10] sm:$0xf]
    %v152 = vld [vmem:[#allocation8 + $0x14] sm:$0xf]
    %v153 = vld [vmem:[#allocation8 + $0x18] sm:$0xf]
    %v154 = vld [vmem:[#allocation8 + $0x1c] sm:$0xf]
    %v155 = vld [vmem:[#allocation8 + $0x20] sm:$0xf]
    %v156 = vld [vmem:[#allocation8 + $0x24] sm:$0xf]
    %v157 = vld [vmem:[#allocation8 + $0x28] sm:$0xf]
    %v158 = vld [vmem:[#allocation8 + $0x2c] sm:$0xf]
    %v159 = vld [vmem:[#allocation8 + $0x30] sm:$0xf]
    %v160 = vld [vmem:[#allocation8 + $0x34] sm:$0xf]
    %v161 = vld [vmem:[#allocation8 + $0x38] sm:$0xf]
    %v162 = vld [vmem:[#allocation8 + $0x3c] sm:$0xf]
    %v163 = vld [vmem:[#allocation8 + $0x40] sm:$0xf]
    %v164 = vld [vmem:[#allocation8 + $0x44] sm:$0xf]
    %v165 = vld [vmem:[#allocation8 + $0x48] sm:$0xf]
    %v166 = vld [vmem:[#allocation8 + $0x4c] sm:$0xf]
    %v167 = vld [vmem:[#allocation8 + $0x50] sm:$0xf]
    %v168 = vld [vmem:[#allocation8 + $0x54] sm:$0xf]
    %v169 = vld [vmem:[#allocation8 + $0x58] sm:$0xf]
    %v170 = vld [vmem:[#allocation8 + $0x5c] sm:$0xf]
    %v171 = vld [vmem:[#allocation8 + $0x60] sm:$0xf]
    %v172 = vld [vmem:[#allocation8 + $0x64] sm:$0xf]
    %v173 = vld [vmem:[#allocation8 + $0x68] sm:$0xf]
    %v174 = vld [vmem:[#allocation8 + $0x6c] sm:$0xf]
    %v175 = vld [vmem:[#allocation8 + $0x70] sm:$0xf]
    %v176 = vld [vmem:[#allocation8 + $0x74] sm:$0xf]
    %v177 = vld [vmem:[#allocation8 + $0x78] sm:$0xf]
    %v178 = vld [vmem:[#allocation8 + $0x7c] sm:$0xf]
    %v179 = vld [vmem:[%s3] sm:$0x1]
    %v180 = vld [vmem:[#allocation9] sm:$0xf]
    %v181 = vld [vmem:[#allocation9 + $0x4] sm:$0xf]
    %v182 = vld [vmem:[#allocation9 + $0x8] sm:$0xf]
    %v183 = vld [vmem:[#allocation9 + $0xc] sm:$0xf]
    %v184 = vld [vmem:[#allocation9 + $0x10] sm:$0xf]
    %v185 = vld [vmem:[#allocation9 + $0x14] sm:$0xf]
    %v186 = vld [vmem:[#allocation9 + $0x18] sm:$0xf]
    %v187 = vld [vmem:[#allocation9 + $0x1c] sm:$0xf]
    %v188 = vld [vmem:[#allocation9 + $0x20] sm:$0xf]
    %v189 = vld [vmem:[#allocation9 + $0x24] sm:$0xf]
    %v190 = vld [vmem:[#allocation9 + $0x28] sm:$0xf]
    %v191 = vld [vmem:[#allocation9 + $0x2c] sm:$0xf]
    %v192 = vld [vmem:[#allocation9 + $0x30] sm:$0xf]
    %v193 = vld [vmem:[#allocation9 + $0x34] sm:$0xf]
    %v194 = vld [vmem:[#allocation9 + $0x38] sm:$0xf]
    %v195 = vld [vmem:[#allocation9 + $0x3c] sm:$0xf]
    %v196 = vld [vmem:[%s5] sm:$0x1]
    %v197 = vld [vmem:[%s6] sm:$0x1]
    %v198 = vld [vmem:[%s7] sm:$0x1]
    %v200 = vlaneseq
    %v201 = vshrl.u32 %v200, 7
    %v202 = vsub.s32 0, %v201
    %v203 = vrot.slane %v179, %v202
    %v221 = vunpack.c.l.b16 %v131
    %v222 = vunpack.c.h.b16 %v131
    %v223 = vunpack.c.l.b16 %v132
    %v224 = vunpack.c.h.b16 %v132
    %v225 = vunpack.c.l.b16 %v133
    %v226 = vunpack.c.h.b16 %v133
    %v227 = vunpack.c.l.b16 %v134
    %v228 = vunpack.c.h.b16 %v134
    %v229 = vunpack.c.l.b16 %v135
    %v230 = vunpack.c.h.b16 %v135
    %v231 = vunpack.c.l.b16 %v136
    %v232 = vunpack.c.h.b16 %v136
    %v233 = vunpack.c.l.b16 %v137
    %v234 = vunpack.c.h.b16 %v137
    %v235 = vunpack.c.l.b16 %v138
    %v236 = vunpack.c.h.b16 %v138
    %v237 = vunpack.c.l.b16 %v139
    %v238 = vunpack.c.h.b16 %v139
    %v239 = vunpack.c.l.b16 %v140
    %v240 = vunpack.c.h.b16 %v140
    %v241 = vunpack.c.l.b16 %v141
    %v242 = vunpack.c.h.b16 %v141
    %v243 = vunpack.c.l.b16 %v142
    %v244 = vunpack.c.h.b16 %v142
    %v245 = vunpack.c.l.b16 %v143
    %v246 = vunpack.c.h.b16 %v143
    %v247 = vunpack.c.l.b16 %v144
    %v248 = vunpack.c.h.b16 %v144
    %v249 = vunpack.c.l.b16 %v145
    %v250 = vunpack.c.h.b16 %v145
    %v251 = vunpack.c.l.b16 %v146
    %v252 = vunpack.c.h.b16 %v146
    %v253 = vpack.c.b16 %v223, %v221
    %v254 = vpack.c.b16 %v224, %v222
    %v255 = vpack.c.b16 %v227, %v225
    %v256 = vpack.c.b16 %v228, %v226
    %v257 = vpack.c.b16 %v231, %v229
    %v258 = vpack.c.b16 %v232, %v230
    %v259 = vpack.c.b16 %v235, %v233
    %v260 = vpack.c.b16 %v236, %v234
    %v261 = vpack.c.b16 %v239, %v237
    %v262 = vpack.c.b16 %v240, %v238
    %v263 = vpack.c.b16 %v243, %v241
    %v264 = vpack.c.b16 %v244, %v242
    %v265 = vpack.c.b16 %v247, %v245
    %v266 = vpack.c.b16 %v248, %v246
    %v267 = vpack.c.b16 %v251, %v249
    %v268 = vpack.c.b16 %v252, %v250
    %v317 = vunpack.c.l.b16 %v147
    %v318 = vunpack.c.l.b16 %v148
    %v319 = vunpack.c.l.b16 %v149
    %v320 = vunpack.c.l.b16 %v150
    %v321 = vunpack.c.l.b16 %v151
    %v322 = vunpack.c.l.b16 %v152
    %v323 = vunpack.c.l.b16 %v153
    %v324 = vunpack.c.l.b16 %v154
    %v325 = vunpack.c.l.b16 %v155
    %v326 = vunpack.c.l.b16 %v156
    %v327 = vunpack.c.l.b16 %v157
    %v328 = vunpack.c.l.b16 %v158
    %v329 = vunpack.c.l.b16 %v159
    %v330 = vunpack.c.l.b16 %v160
    %v331 = vunpack.c.l.b16 %v161
    %v332 = vunpack.c.l.b16 %v162
    %v333 = vunpack.c.l.b16 %v163
    %v334 = vunpack.c.l.b16 %v164
    %v335 = vunpack.c.l.b16 %v165
    %v336 = vunpack.c.l.b16 %v166
    %v337 = vunpack.c.l.b16 %v167
    %v338 = vunpack.c.l.b16 %v168
    %v339 = vunpack.c.l.b16 %v169
    %v340 = vunpack.c.l.b16 %v170
    %v341 = vunpack.c.l.b16 %v171
    %v342 = vunpack.c.l.b16 %v172
    %v343 = vunpack.c.l.b16 %v173
    %v344 = vunpack.c.l.b16 %v174
    %v345 = vunpack.c.l.b16 %v175
    %v346 = vunpack.c.l.b16 %v176
    %v347 = vunpack.c.l.b16 %v177
    %v348 = vunpack.c.l.b16 %v178
    %v349 = vpack.c.b16 %v318, %v317
    %v350 = vpack.c.b16 %v320, %v319
    %v351 = vpack.c.b16 %v322, %v321
    %v352 = vpack.c.b16 %v324, %v323
    %v353 = vpack.c.b16 %v326, %v325
    %v354 = vpack.c.b16 %v328, %v327
    %v355 = vpack.c.b16 %v330, %v329
    %v356 = vpack.c.b16 %v332, %v331
    %v357 = vpack.c.b16 %v334, %v333
    %v358 = vpack.c.b16 %v336, %v335
    %v359 = vpack.c.b16 %v338, %v337
    %v360 = vpack.c.b16 %v340, %v339
    %v361 = vpack.c.b16 %v342, %v341
    %v362 = vpack.c.b16 %v344, %v343
    %v363 = vpack.c.b16 %v346, %v345
    %v364 = vpack.c.b16 %v348, %v347
    %381 = vmatprep.subr.bf16.mxu0 0
    %382 = vmatpush1.bf16.msra.mxu0 %v349
    %383 = vmatprep.subr.bf16.mxu0 0
    %384 = vmatpush1.bf16.msra.mxu0 %v350
    %385 = vmatprep.subr.bf16.mxu0 0
    %386 = vmatpush1.bf16.msra.mxu0 %v351
    %387 = vmatprep.subr.bf16.mxu0 0
    %388 = vmatpush1.bf16.msra.mxu0 %v352
    %389 = vmatprep.subr.bf16.mxu0 0
    %390 = vmatpush1.bf16.msra.mxu0 %v353
    %391 = vmatprep.subr.bf16.mxu0 0
    %392 = vmatpush1.bf16.msra.mxu0 %v354
    %393 = vmatprep.subr.bf16.mxu0 0
    %394 = vmatpush1.bf16.msra.mxu0 %v355
    %395 = vmatprep.subr.bf16.mxu0 0
    %396 = vmatpush1.bf16.msra.mxu0 %v356
    %397 = vmatprep.subr.bf16.mxu0 0
    %398 = vmatpush1.bf16.msra.mxu0 %v357
    %399 = vmatprep.subr.bf16.mxu0 0
    %400 = vmatpush1.bf16.msra.mxu0 %v358
    %401 = vmatprep.subr.bf16.mxu0 0
    %402 = vmatpush1.bf16.msra.mxu0 %v359
    %403 = vmatprep.subr.bf16.mxu0 0
    %404 = vmatpush1.bf16.msra.mxu0 %v360
    %405 = vmatprep.subr.bf16.mxu0 0
    %406 = vmatpush1.bf16.msra.mxu0 %v361
    %407 = vmatprep.subr.bf16.mxu0 0
    %408 = vmatpush1.bf16.msra.mxu0 %v362
    %409 = vmatprep.subr.bf16.mxu0 0
    %410 = vmatpush1.bf16.msra.mxu0 %v363
    %411 = vmatprep.subr.bf16.mxu0 0
    %412 = vmatpush1.bf16.msra.mxu0 %v364
    %413 = vmatprep.mubr.bf16.mxu0 %v254
    %414 = vmatmul.mubr.bf16.gmra.mrb[0].mxu0 %v253
    %v415 = vpop.f32.mrb[0].mxu0
    %v416 = vadd.f32 %v203, %v415
    %v417 = vpop.f32.mrb[0].mxu0
    %v418 = vpop.f32.mrb[0].mxu0
    %v419 = vadd.f32 %v203, %v418
    %v420 = vpop.f32.mrb[0].mxu0
    %421 = vmatprep.mubr.bf16.mxu0 %v256
    %422 = vmatmul.mubr.bf16.gmra.mrb[0].mxu0 %v255
    %v423 = vpop.f32.mrb[0].mxu0
    %v424 = vadd.f32 %v203, %v423
    %v425 = vpop.f32.mrb[0].mxu0
    %v426 = vpop.f32.mrb[0].mxu0
    %v427 = vadd.f32 %v203, %v426
    %v428 = vpop.f32.mrb[0].mxu0
    %429 = vmatprep.mubr.bf16.mxu0 %v258
    %430 = vmatmul.mubr.bf16.gmra.mrb[0].mxu0 %v257
    %v431 = vpop.f32.mrb[0].mxu0
    %v432 = vadd.f32 %v203, %v431
    %v433 = vpop.f32.mrb[0].mxu0
    %v434 = vpop.f32.mrb[0].mxu0
    %v435 = vadd.f32 %v203, %v434
    %v436 = vpop.f32.mrb[0].mxu0
    %437 = vmatprep.mubr.bf16.mxu0 %v260
    %438 = vmatmul.mubr.bf16.gmra.mrb[0].mxu0 %v259
    %v439 = vpop.f32.mrb[0].mxu0
    %v440 = vadd.f32 %v203, %v439
    %v441 = vpop.f32.mrb[0].mxu0
    %v442 = vpop.f32.mrb[0].mxu0
    %v443 = vadd.f32 %v203, %v442
    %v444 = vpop.f32.mrb[0].mxu0
    %445 = vmatprep.mubr.bf16.mxu0 %v262
    %446 = vmatmul.mubr.bf16.gmra.mrb[0].mxu0 %v261
    %v447 = vpop.f32.mrb[0].mxu0
    %v448 = vadd.f32 %v203, %v447
    %v449 = vpop.f32.mrb[0].mxu0
    %v450 = vpop.f32.mrb[0].mxu0
    %v451 = vadd.f32 %v203, %v450
    %v452 = vpop.f32.mrb[0].mxu0
    %453 = vmatprep.mubr.bf16.mxu0 %v264
    %454 = vmatmul.mubr.bf16.gmra.mrb[0].mxu0 %v263
    %v455 = vpop.f32.mrb[0].mxu0
    %v456 = vadd.f32 %v203, %v455
    %v457 = vpop.f32.mrb[0].mxu0
    %v458 = vpop.f32.mrb[0].mxu0
    %v459 = vadd.f32 %v203, %v458
    %v460 = vpop.f32.mrb[0].mxu0
    %461 = vmatprep.mubr.bf16.mxu0 %v266
    %462 = vmatmul.mubr.bf16.gmra.mrb[0].mxu0 %v265
    %v463 = vpop.f32.mrb[0].mxu0
    %v464 = vadd.f32 %v203, %v463
    %v465 = vpop.f32.mrb[0].mxu0
    %v466 = vpop.f32.mrb[0].mxu0
    %v467 = vadd.f32 %v203, %v466
    %v468 = vpop.f32.mrb[0].mxu0
    %469 = vmatprep.mubr.bf16.mxu0 %v268
    %470 = vmatmul.mubr.bf16.gmra.mrb[0].mxu0 %v267
    %v471 = vpop.f32.mrb[0].mxu0
    %v472 = vadd.f32 %v203, %v471
    %v473 = vpop.f32.mrb[0].mxu0
    %v474 = vpop.f32.mrb[0].mxu0
    %v475 = vadd.f32 %v203, %v474
    %v476 = vpop.f32.mrb[0].mxu0
    %477 = vdwg.mxu0
    %v478 = vmul.f32 %v416, %v416
    %v479 = vmul.f32 %v419, %v419
    %v480 = vmul.f32 %v424, %v424
    %v481 = vmul.f32 %v427, %v427
    %v482 = vmul.f32 %v432, %v432
    %v483 = vmul.f32 %v435, %v435
    %v484 = vmul.f32 %v440, %v440
    %v485 = vmul.f32 %v443, %v443
    %v486 = vmul.f32 %v448, %v448
    %v487 = vmul.f32 %v451, %v451
    %v488 = vmul.f32 %v456, %v456
    %v489 = vmul.f32 %v459, %v459
    %v490 = vmul.f32 %v464, %v464
    %v491 = vmul.f32 %v467, %v467
    %v492 = vmul.f32 %v472, %v472
    %v493 = vmul.f32 %v475, %v475
    %v494 = vmul.f32 %v416, %v478
    %v495 = vmul.f32 %v419, %v479
    %v496 = vmul.f32 %v424, %v480
    %v497 = vmul.f32 %v427, %v481
    %v498 = vmul.f32 %v432, %v482
    %v499 = vmul.f32 %v435, %v483
    %v500 = vmul.f32 %v440, %v484
    %v501 = vmul.f32 %v443, %v485
    %v502 = vmul.f32 %v448, %v486
    %v503 = vmul.f32 %v451, %v487
    %v504 = vmul.f32 %v456, %v488
    %v505 = vmul.f32 %v459, %v489
    %v506 = vmul.f32 %v464, %v490
    %v507 = vmul.f32 %v467, %v491
    %v508 = vmul.f32 %v472, %v492
    %v509 = vmul.f32 %v475, %v493
    %v510 = vmul.f32 %v494, 0.044715
    %v511 = vmul.f32 %v495, 0.044715
    %v512 = vmul.f32 %v496, 0.044715
    %v513 = vmul.f32 %v497, 0.044715
    %v514 = vmul.f32 %v498, 0.044715
    %v515 = vmul.f32 %v499, 0.044715
    %v516 = vmul.f32 %v500, 0.044715
    %v517 = vmul.f32 %v501, 0.044715
    %v518 = vmul.f32 %v502, 0.044715
    %v519 = vmul.f32 %v503, 0.044715
    %v520 = vmul.f32 %v504, 0.044715
    %v521 = vmul.f32 %v505, 0.044715
    %v522 = vmul.f32 %v506, 0.044715
    %v523 = vmul.f32 %v507, 0.044715
    %v524 = vmul.f32 %v508, 0.044715
    %v525 = vmul.f32 %v509, 0.044715
    %v526 = vadd.f32 %v416, %v510
    %v527 = vadd.f32 %v419, %v511
    %v528 = vadd.f32 %v424, %v512
    %v529 = vadd.f32 %v427, %v513
    %v530 = vadd.f32 %v432, %v514
    %v531 = vadd.f32 %v435, %v515
    %v532 = vadd.f32 %v440, %v516
    %v533 = vadd.f32 %v443, %v517
    %v534 = vadd.f32 %v448, %v518
    %v535 = vadd.f32 %v451, %v519
    %v536 = vadd.f32 %v456, %v520
    %v537 = vadd.f32 %v459, %v521
    %v538 = vadd.f32 %v464, %v522
    %v539 = vadd.f32 %v467, %v523
    %v540 = vadd.f32 %v472, %v524
    %v541 = vadd.f32 %v475, %v525
    %v542 = vmul.f32 %v526, 0.7978846
    %v543 = vmul.f32 %v527, 0.7978846
    %v544 = vmul.f32 %v528, 0.7978846
    %v545 = vmul.f32 %v529, 0.7978846
    %v546 = vmul.f32 %v530, 0.7978846
    %v547 = vmul.f32 %v531, 0.7978846
    %v548 = vmul.f32 %v532, 0.7978846
    %v549 = vmul.f32 %v533, 0.7978846
    %v550 = vmul.f32 %v534, 0.7978846
    %v551 = vmul.f32 %v535, 0.7978846
    %v552 = vmul.f32 %v536, 0.7978846
    %v553 = vmul.f32 %v537, 0.7978846
    %v554 = vmul.f32 %v538, 0.7978846
    %v555 = vmul.f32 %v539, 0.7978846
    %v556 = vmul.f32 %v540, 0.7978846
    %v557 = vmul.f32 %v541, 0.7978846
    %v558 = vtanh.pop %v542
    %v559 = vtanh.pop %v543
    %v560 = vtanh.pop %v544
    %v561 = vtanh.pop %v545
    %v562 = vtanh.pop %v546
    %v563 = vtanh.pop %v547
    %v564 = vtanh.pop %v548
    %v565 = vtanh.pop %v549
    %v566 = vtanh.pop %v550
    %v567 = vtanh.pop %v551
    %v568 = vtanh.pop %v552
    %v569 = vtanh.pop %v553
    %v570 = vtanh.pop %v554
    %v571 = vtanh.pop %v555
    %v572 = vtanh.pop %v556
    %v573 = vtanh.pop %v557
    %v574 = vadd.f32 %v558, 1.0
    %v575 = vadd.f32 %v559, 1.0
    %v576 = vadd.f32 %v560, 1.0
    %v577 = vadd.f32 %v561, 1.0
    %v578 = vadd.f32 %v562, 1.0
    %v579 = vadd.f32 %v563, 1.0
    %v580 = vadd.f32 %v564, 1.0
    %v581 = vadd.f32 %v565, 1.0
    %v582 = vadd.f32 %v566, 1.0
    %v583 = vadd.f32 %v567, 1.0
    %v584 = vadd.f32 %v568, 1.0
    %v585 = vadd.f32 %v569, 1.0
    %v586 = vadd.f32 %v570, 1.0
    %v587 = vadd.f32 %v571, 1.0
    %v588 = vadd.f32 %v572, 1.0
    %v589 = vadd.f32 %v573, 1.0
    %v590 = vmul.f32 %v574, 0.5
    %v591 = vmul.f32 %v575, 0.5
    %v592 = vmul.f32 %v576, 0.5
    %v593 = vmul.f32 %v577, 0.5
    %v594 = vmul.f32 %v578, 0.5
    %v595 = vmul.f32 %v579, 0.5
    %v596 = vmul.f32 %v580, 0.5
    %v597 = vmul.f32 %v581, 0.5
    %v598 = vmul.f32 %v582, 0.5
    %v599 = vmul.f32 %v583, 0.5
    %v600 = vmul.f32 %v584, 0.5
    %v601 = vmul.f32 %v585, 0.5
    %v602 = vmul.f32 %v586, 0.5
    %v603 = vmul.f32 %v587, 0.5
    %v604 = vmul.f32 %v588, 0.5
    %v605 = vmul.f32 %v589, 0.5
    %v606 = vmul.f32 %v416, %v590
    %v607 = vmul.f32 %v419, %v591
    %v608 = vmul.f32 %v424, %v592
    %v609 = vmul.f32 %v427, %v593
    %v610 = vmul.f32 %v432, %v594
    %v611 = vmul.f32 %v435, %v595
    %v612 = vmul.f32 %v440, %v596
    %v613 = vmul.f32 %v443, %v597
    %v614 = vmul.f32 %v448, %v598
    %v615 = vmul.f32 %v451, %v599
    %v616 = vmul.f32 %v456, %v600
    %v617 = vmul.f32 %v459, %v601
    %v618 = vmul.f32 %v464, %v602
    %v619 = vmul.f32 %v467, %v603
    %v620 = vmul.f32 %v472, %v604
    %v621 = vmul.f32 %v475, %v605
    %v622 = vpack.c.bf16 %v607, %v606
    %v623 = vpack.c.bf16 %v609, %v608
    %v624 = vpack.c.bf16 %v611, %v610
    %v625 = vpack.c.bf16 %v613, %v612
    %v626 = vpack.c.bf16 %v615, %v614
    %v627 = vpack.c.bf16 %v617, %v616
    %v628 = vpack.c.bf16 %v619, %v618
    %v629 = vpack.c.bf16 %v621, %v620
    %v631 = vlaneseq
    %v632 = vshrl.u32 %v631, 7
    %v633 = vsub.s32 0, %v632
    %v634 = vrot.slane %v196, %v633
    %v652 = vunpack.c.l.b16 %v180
    %v653 = vunpack.c.l.b16 %v181
    %v654 = vunpack.c.l.b16 %v182
    %v655 = vunpack.c.l.b16 %v183
    %v656 = vunpack.c.l.b16 %v184
    %v657 = vunpack.c.l.b16 %v185
    %v658 = vunpack.c.l.b16 %v186
    %v659 = vunpack.c.l.b16 %v187
    %v660 = vunpack.c.l.b16 %v188
    %v661 = vunpack.c.l.b16 %v189
    %v662 = vunpack.c.l.b16 %v190
    %v663 = vunpack.c.l.b16 %v191
    %v664 = vunpack.c.l.b16 %v192
    %v665 = vunpack.c.l.b16 %v193
    %v666 = vunpack.c.l.b16 %v194
    %v667 = vunpack.c.l.b16 %v195
    %v668 = vpack.c.b16 %v653, %v652
    %v669 = vpack.c.b16 %v655, %v654
    %v670 = vpack.c.b16 %v657, %v656
    %v671 = vpack.c.b16 %v659, %v658
    %v672 = vpack.c.b16 %v661, %v660
    %v673 = vpack.c.b16 %v663, %v662
    %v674 = vpack.c.b16 %v665, %v664
    %v675 = vpack.c.b16 %v667, %v666
    %684 = vmatprep.subr.bf16.mxu0 0
    %685 = vmatpush1.bf16.msra.mxu0 %v668
    %686 = vmatprep.subr.bf16.mxu0 0
    %687 = vmatpush1.bf16.msra.mxu0 %v669
    %688 = vmatprep.subr.bf16.mxu0 0
    %689 = vmatpush1.bf16.msra.mxu0 %v670
    %690 = vmatprep.subr.bf16.mxu0 0
    %691 = vmatpush1.bf16.msra.mxu0 %v671
    %692 = vmatprep.subr.bf16.mxu0 0
    %693 = vmatpush1.bf16.msra.mxu0 %v672
    %694 = vmatprep.subr.bf16.mxu0 0
    %695 = vmatpush1.bf16.msra.mxu0 %v673
    %696 = vmatprep.subr.bf16.mxu0 0
    %697 = vmatpush1.bf16.msra.mxu0 %v674
    %698 = vmatprep.subr.bf16.mxu0 0
    %699 = vmatpush1.bf16.msra.mxu0 %v675
    %700 = vmatprep.subr.bf16.mxu0 0
    %701 = vmatpush1.bf16.msra.mxu0 0
    %702 = vmatprep.subr.bf16.mxu0 0
    %703 = vmatpush1.bf16.msra.mxu0 0
    %704 = vmatprep.subr.bf16.mxu0 0
    %705 = vmatpush1.bf16.msra.mxu0 0
    %706 = vmatprep.subr.bf16.mxu0 0
    %707 = vmatpush1.bf16.msra.mxu0 0
    %708 = vmatprep.subr.bf16.mxu0 0
    %709 = vmatpush1.bf16.msra.mxu0 0
    %710 = vmatprep.subr.bf16.mxu0 0
    %711 = vmatpush1.bf16.msra.mxu0 0
    %712 = vmatprep.subr.bf16.mxu0 0
    %713 = vmatpush1.bf16.msra.mxu0 0
    %714 = vmatprep.subr.bf16.mxu0 0
    %715 = vmatpush1.bf16.msra.mxu0 0
    %716 = vmatprep.mubr.bf16.mxu0 0
    %717 = vmatmul.mubr.bf16.gmra.mrb[0].mxu0 %v622
    %v718 = vpop.f32.mrb[0].mxu0
    %v719 = vadd.f32 %v634, %v718
    %v720 = vpop.f32.mrb[0].mxu0
    %v721 = vpop.f32.mrb[0].mxu0
    %v722 = vadd.f32 %v634, %v721
    %v723 = vpop.f32.mrb[0].mxu0
    %724 = vmatprep.mubr.bf16.mxu0 0
    %725 = vmatmul.mubr.bf16.gmra.mrb[0].mxu0 %v623
    %v726 = vpop.f32.mrb[0].mxu0
    %v727 = vadd.f32 %v634, %v726
    %v728 = vpop.f32.mrb[0].mxu0
    %v729 = vpop.f32.mrb[0].mxu0
    %v730 = vadd.f32 %v634, %v729
    %v731 = vpop.f32.mrb[0].mxu0
    %732 = vmatprep.mubr.bf16.mxu0 0
    %733 = vmatmul.mubr.bf16.gmra.mrb[0].mxu0 %v624
    %v734 = vpop.f32.mrb[0].mxu0
    %v735 = vadd.f32 %v634, %v734
    %v736 = vpop.f32.mrb[0].mxu0
    %v737 = vpop.f32.mrb[0].mxu0
    %v738 = vadd.f32 %v634, %v737
    %v739 = vpop.f32.mrb[0].mxu0
    %740 = vmatprep.mubr.bf16.mxu0 0
    %741 = vmatmul.mubr.bf16.gmra.mrb[0].mxu0 %v625
    %v742 = vpop.f32.mrb[0].mxu0
    %v743 = vadd.f32 %v634, %v742
    %v744 = vpop.f32.mrb[0].mxu0
    %v745 = vpop.f32.mrb[0].mxu0
    %v746 = vadd.f32 %v634, %v745
    %v747 = vpop.f32.mrb[0].mxu0
    %748 = vmatprep.mubr.bf16.mxu0 0
    %749 = vmatmul.mubr.bf16.gmra.mrb[0].mxu0 %v626
    %v750 = vpop.f32.mrb[0].mxu0
    %v751 = vadd.f32 %v634, %v750
    %v752 = vpop.f32.mrb[0].mxu0
    %v753 = vpop.f32.mrb[0].mxu0
    %v754 = vadd.f32 %v634, %v753
    %v755 = vpop.f32.mrb[0].mxu0
    %756 = vmatprep.mubr.bf16.mxu0 0
    %757 = vmatmul.mubr.bf16.gmra.mrb[0].mxu0 %v627
    %v758 = vpop.f32.mrb[0].mxu0
    %v759 = vadd.f32 %v634, %v758
    %v760 = vpop.f32.mrb[0].mxu0
    %v761 = vpop.f32.mrb[0].mxu0
    %v762 = vadd.f32 %v634, %v761
    %v763 = vpop.f32.mrb[0].mxu0
    %764 = vmatprep.mubr.bf16.mxu0 0
    %765 = vmatmul.mubr.bf16.gmra.mrb[0].mxu0 %v628
    %v766 = vpop.f32.mrb[0].mxu0
    %v767 = vadd.f32 %v634, %v766
    %v768 = vpop.f32.mrb[0].mxu0
    %v769 = vpop.f32.mrb[0].mxu0
    %v770 = vadd.f32 %v634, %v769
    %v771 = vpop.f32.mrb[0].mxu0
    %772 = vmatprep.mubr.bf16.mxu0 0
    %773 = vmatmul.mubr.bf16.gmra.mrb[0].mxu0 %v629
    %v774 = vpop.f32.mrb[0].mxu0
    %v775 = vadd.f32 %v634, %v774
    %v776 = vpop.f32.mrb[0].mxu0
    %v777 = vpop.f32.mrb[0].mxu0
    %v778 = vadd.f32 %v634, %v777
    %v779 = vpop.f32.mrb[0].mxu0
    %780 = vdwg.mxu0
    %v781 = vadd.f32 %v719, %v416
    %v782 = vadd.f32 %v722, %v419
    %v783 = vadd.f32 %v727, %v424
    %v784 = vadd.f32 %v730, %v427
    %v785 = vadd.f32 %v735, %v432
    %v786 = vadd.f32 %v738, %v435
    %v787 = vadd.f32 %v743, %v440
    %v788 = vadd.f32 %v746, %v443
    %v789 = vadd.f32 %v751, %v448
    %v790 = vadd.f32 %v754, %v451
    %v791 = vadd.f32 %v759, %v456
    %v792 = vadd.f32 %v762, %v459
    %v793 = vadd.f32 %v767, %v464
    %v794 = vadd.f32 %v770, %v467
    %v795 = vadd.f32 %v775, %v472
    %v796 = vadd.f32 %v778, %v475
    %797 = vadd.xlane.f32.xlu0 %v781
    %v798 = vpop.xlane.xlu0 %797
    %799 = vadd.xlane.f32.xlu0 %v782
    %v800 = vpop.xlane.xlu0 %799
    %801 = vadd.xlane.f32.xlu0 %v783
    %v802 = vpop.xlane.xlu0 %801
    %803 = vadd.xlane.f32.xlu0 %v784
    %v804 = vpop.xlane.xlu0 %803
    %805 = vadd.xlane.f32.xlu0 %v785
    %v806 = vpop.xlane.xlu0 %805
    %807 = vadd.xlane.f32.xlu0 %v786
    %v808 = vpop.xlane.xlu0 %807
    %809 = vadd.xlane.f32.xlu0 %v787
    %v810 = vpop.xlane.xlu0 %809
    %811 = vadd.xlane.f32.xlu0 %v788
    %v812 = vpop.xlane.xlu0 %811
    %813 = vadd.xlane.f32.xlu0 %v789
    %v814 = vpop.xlane.xlu0 %813
    %815 = vadd.xlane.f32.xlu0 %v790
    %v816 = vpop.xlane.xlu0 %815
    %817 = vadd.xlane.f32.xlu0 %v791
    %v818 = vpop.xlane.xlu0 %817
    %819 = vadd.xlane.f32.xlu0 %v792
    %v820 = vpop.xlane.xlu0 %819
    %821 = vadd.xlane.f32.xlu0 %v793
    %v822 = vpop.xlane.xlu0 %821
    %823 = vadd.xlane.f32.xlu0 %v794
    %v824 = vpop.xlane.xlu0 %823
    %825 = vadd.xlane.f32.xlu0 %v795
    %v826 = vpop.xlane.xlu0 %825
    %827 = vadd.xlane.f32.xlu0 %v796
    %v828 = vpop.xlane.xlu0 %827
    %v829 = vrcp.pop 128.0
    %v830 = vmul.f32 %v798, %v829
    %v831 = vmul.f32 %v800, %v829
    %v832 = vmul.f32 %v802, %v829
    %v833 = vmul.f32 %v804, %v829
    %v834 = vmul.f32 %v806, %v829
    %v835 = vmul.f32 %v808, %v829
    %v836 = vmul.f32 %v810, %v829
    %v837 = vmul.f32 %v812, %v829
    %v838 = vmul.f32 %v814, %v829
    %v839 = vmul.f32 %v816, %v829
    %v840 = vmul.f32 %v818, %v829
    %v841 = vmul.f32 %v820, %v829
    %v842 = vmul.f32 %v822, %v829
    %v843 = vmul.f32 %v824, %v829
    %v844 = vmul.f32 %v826, %v829
    %v845 = vmul.f32 %v828, %v829
    %v846 = vsub.f32 %v781, %v830
    %v847 = vsub.f32 %v782, %v831
    %v848 = vsub.f32 %v783, %v832
    %v849 = vsub.f32 %v784, %v833
    %v850 = vsub.f32 %v785, %v834
    %v851 = vsub.f32 %v786, %v835
    %v852 = vsub.f32 %v787, %v836
    %v853 = vsub.f32 %v788, %v837
    %v854 = vsub.f32 %v789, %v838
    %v855 = vsub.f32 %v790, %v839
    %v856 = vsub.f32 %v791, %v840
    %v857 = vsub.f32 %v792, %v841
    %v858 = vsub.f32 %v793, %v842
    %v859 = vsub.f32 %v794, %v843
    %v860 = vsub.f32 %v795, %v844
    %v861 = vsub.f32 %v796, %v845
    %v862 = vmul.f32 %v846, %v846
    %v863 = vmul.f32 %v847, %v847
    %v864 = vmul.f32 %v848, %v848
    %v865 = vmul.f32 %v849, %v849
    %v866 = vmul.f32 %v850, %v850
    %v867 = vmul.f32 %v851, %v851
    %v868 = vmul.f32 %v852, %v852
    %v869 = vmul.f32 %v853, %v853
    %v870 = vmul.f32 %v854, %v854
    %v871 = vmul.f32 %v855, %v855
    %v872 = vmul.f32 %v856, %v856
    %v873 = vmul.f32 %v857, %v857
    %v874 = vmul.f32 %v858, %v858
    %v875 = vmul.f32 %v859, %v859
    %v876 = vmul.f32 %v860, %v860
    %v877 = vmul.f32 %v861, %v861
    %878 = vadd.xlane.f32.xlu0 %v862
    %v879 = vpop.xlane.xlu0 %878
    %880 = vadd.xlane.f32.xlu0 %v863
    %v881 = vpop.xlane.xlu0 %880
    %882 = vadd.xlane.f32.xlu0 %v864
    %v883 = vpop.xlane.xlu0 %882
    %884 = vadd.xlane.f32.xlu0 %v865
    %v885 = vpop.xlane.xlu0 %884
    %886 = vadd.xlane.f32.xlu0 %v866
    %v887 = vpop.xlane.xlu0 %886
    %888 = vadd.xlane.f32.xlu0 %v867
    %v889 = vpop.xlane.xlu0 %888
    %890 = vadd.xlane.f32.xlu0 %v868
    %v891 = vpop.xlane.xlu0 %890
    %892 = vadd.xlane.f32.xlu0 %v869
    %v893 = vpop.xlane.xlu0 %892
    %894 = vadd.xlane.f32.xlu0 %v870
    %v895 = vpop.xlane.xlu0 %894
    %896 = vadd.xlane.f32.xlu0 %v871
    %v897 = vpop.xlane.xlu0 %896
    %898 = vadd.xlane.f32.xlu0 %v872
    %v899 = vpop.xlane.xlu0 %898
    %900 = vadd.xlane.f32.xlu0 %v873
    %v901 = vpop.xlane.xlu0 %900
    %902 = vadd.xlane.f32.xlu0 %v874
    %v903 = vpop.xlane.xlu0 %902
    %904 = vadd.xlane.f32.xlu0 %v875
    %v905 = vpop.xlane.xlu0 %904
    %906 = vadd.xlane.f32.xlu0 %v876
    %v907 = vpop.xlane.xlu0 %906
    %908 = vadd.xlane.f32.xlu0 %v877
    %v909 = vpop.xlane.xlu0 %908
    %v910 = vmul.f32 %v879, %v829
    %v911 = vmul.f32 %v881, %v829
    %v912 = vmul.f32 %v883, %v829
    %v913 = vmul.f32 %v885, %v829
    %v914 = vmul.f32 %v887, %v829
    %v915 = vmul.f32 %v889, %v829
    %v916 = vmul.f32 %v891, %v829
    %v917 = vmul.f32 %v893, %v829
    %v918 = vmul.f32 %v895, %v829
    %v919 = vmul.f32 %v897, %v829
    %v920 = vmul.f32 %v899, %v829
    %v921 = vmul.f32 %v901, %v829
    %v922 = vmul.f32 %v903, %v829
    %v923 = vmul.f32 %v905, %v829
    %v924 = vmul.f32 %v907, %v829
    %v925 = vmul.f32 %v909, %v829
    %v926 = vadd.f32 %v910, 1e-05
    %v927 = vadd.f32 %v911, 1e-05
    %v928 = vadd.f32 %v912, 1e-05
    %v929 = vadd.f32 %v913, 1e-05
    %v930 = vadd.f32 %v914, 1e-05
    %v931 = vadd.f32 %v915, 1e-05
    %v932 = vadd.f32 %v916, 1e-05
    %v933 = vadd.f32 %v917, 1e-05
    %v934 = vadd.f32 %v918, 1e-05
    %v935 = vadd.f32 %v919, 1e-05
    %v936 = vadd.f32 %v920, 1e-05
    %v937 = vadd.f32 %v921, 1e-05
    %v938 = vadd.f32 %v922, 1e-05
    %v939 = vadd.f32 %v923, 1e-05
    %v940 = vadd.f32 %v924, 1e-05
    %v941 = vadd.f32 %v925, 1e-05
    %v942 = vrsqrt.pop %v926
    %v943 = vrsqrt.pop %v927
    %v944 = vrsqrt.pop %v928
    %v945 = vrsqrt.pop %v929
    %v946 = vrsqrt.pop %v930
    %v947 = vrsqrt.pop %v931
    %v948 = vrsqrt.pop %v932
    %v949 = vrsqrt.pop %v933
    %v950 = vrsqrt.pop %v934
    %v951 = vrsqrt.pop %v935
    %v952 = vrsqrt.pop %v936
    %v953 = vrsqrt.pop %v937
    %v954 = vrsqrt.pop %v938
    %v955 = vrsqrt.pop %v939
    %v956 = vrsqrt.pop %v940
    %v957 = vrsqrt.pop %v941
    %v958 = vmul.f32 %v846, %v942
    %v959 = vmul.f32 %v847, %v943
    %v960 = vmul.f32 %v848, %v944
    %v961 = vmul.f32 %v849, %v945
    %v962 = vmul.f32 %v850, %v946
    %v963 = vmul.f32 %v851, %v947
    %v964 = vmul.f32 %v852, %v948
    %v965 = vmul.f32 %v853, %v949
    %v966 = vmul.f32 %v854, %v950
    %v967 = vmul.f32 %v855, %v951
    %v968 = vmul.f32 %v856, %v952
    %v969 = vmul.f32 %v857, %v953
    %v970 = vmul.f32 %v858, %v954
    %v971 = vmul.f32 %v859, %v955
    %v972 = vmul.f32 %v860, %v956
    %v973 = vmul.f32 %v861, %v957
    %v975 = vlaneseq
    %v976 = vshrl.u32 %v975, 7
    %v977 = vsub.s32 0, %v976
    %v978 = vrot.slane %v197, %v977
    %v980 = vmul.f32 %v958, %v978
    %v981 = vmul.f32 %v959, %v978
    %v982 = vmul.f32 %v960, %v978
    %v983 = vmul.f32 %v961, %v978
    %v984 = vmul.f32 %v962, %v978
    %v985 = vmul.f32 %v963, %v978
    %v986 = vmul.f32 %v964, %v978
    %v987 = vmul.f32 %v965, %v978
    %v988 = vmul.f32 %v966, %v978
    %v989 = vmul.f32 %v967, %v978
    %v990 = vmul.f32 %v968, %v978
    %v991 = vmul.f32 %v969, %v978
    %v992 = vmul.f32 %v970, %v978
    %v993 = vmul.f32 %v971, %v978
    %v994 = vmul.f32 %v972, %v978
    %v995 = vmul.f32 %v973, %v978
    %v997 = vlaneseq
    %v998 = vshrl.u32 %v997, 7
    %v999 = vsub.s32 0, %v998
    %v1000 = vrot.slane %v198, %v999
    %v1002 = vadd.f32 %v980, %v1000
    %v1003 = vadd.f32 %v981, %v1000
    %v1004 = vadd.f32 %v982, %v1000
    %v1005 = vadd.f32 %v983, %v1000
    %v1006 = vadd.f32 %v984, %v1000
    %v1007 = vadd.f32 %v985, %v1000
    %v1008 = vadd.f32 %v986, %v1000
    %v1009 = vadd.f32 %v987, %v1000
    %v1010 = vadd.f32 %v988, %v1000
    %v1011 = vadd.f32 %v989, %v1000
    %v1012 = vadd.f32 %v990, %v1000
    %v1013 = vadd.f32 %v991, %v1000
    %v1014 = vadd.f32 %v992, %v1000
    %v1015 = vadd.f32 %v993, %v1000
    %v1016 = vadd.f32 %v994, %v1000
    %v1017 = vadd.f32 %v995, %v1000
    %v1018 = vld [vmem:[#allocation6] sm:$0xf]
    %v1019 = vld [vmem:[#allocation6 + $0x4] sm:$0xf]
    %v1020 = vld [vmem:[#allocation6 + $0x8] sm:$0xf]
    %v1021 = vld [vmem:[#allocation6 + $0xc] sm:$0xf]
    %v1022 = vld [vmem:[#allocation6 + $0x10] sm:$0xf]
    %v1023 = vld [vmem:[#allocation6 + $0x14] sm:$0xf]
    %v1024 = vld [vmem:[#allocation6 + $0x18] sm:$0xf]
    %v1025 = vld [vmem:[#allocation6 + $0x1c] sm:$0xf]
    %v1026 = vld [vmem:[#allocation6 + $0x20] sm:$0xf]
    %v1027 = vld [vmem:[#allocation6 + $0x24] sm:$0xf]
    %v1028 = vld [vmem:[#allocation6 + $0x28] sm:$0xf]
    %v1029 = vld [vmem:[#allocation6 + $0x2c] sm:$0xf]
    %v1030 = vld [vmem:[#allocation6 + $0x30] sm:$0xf]
    %v1031 = vld [vmem:[#allocation6 + $0x34] sm:$0xf]
    %v1032 = vld [vmem:[#allocation6 + $0x38] sm:$0xf]
    %v1033 = vld [vmem:[#allocation6 + $0x3c] sm:$0xf]
    %v1034 = vld [vmem:[#allocation11] sm:$0xf]
    %v1035 = vld [vmem:[#allocation11 + $0x4] sm:$0xf]
    %v1036 = vld [vmem:[#allocation11 + $0x8] sm:$0xf]
    %v1037 = vld [vmem:[#allocation11 + $0xc] sm:$0xf]
    %v1038 = vld [vmem:[#allocation11 + $0x10] sm:$0xf]
    %v1039 = vld [vmem:[#allocation11 + $0x14] sm:$0xf]
    %v1040 = vld [vmem:[#allocation11 + $0x18] sm:$0xf]
    %v1041 = vld [vmem:[#allocation11 + $0x1c] sm:$0xf]
    %v1042 = vld [vmem:[#allocation11 + $0x20] sm:$0xf]
    %v1043 = vld [vmem:[#allocation11 + $0x24] sm:$0xf]
    %v1044 = vld [vmem:[#allocation11 + $0x28] sm:$0xf]
    %v1045 = vld [vmem:[#allocation11 + $0x2c] sm:$0xf]
    %v1046 = vld [vmem:[#allocation11 + $0x30] sm:$0xf]
    %v1047 = vld [vmem:[#allocation11 + $0x34] sm:$0xf]
    %v1048 = vld [vmem:[#allocation11 + $0x38] sm:$0xf]
    %v1049 = vld [vmem:[#allocation11 + $0x3c] sm:$0xf]
    %v1050 = vld [vmem:[%s9] sm:$0x1]
    %v1051 = vld [vmem:[#allocation12] sm:$0xf]
    %v1052 = vld [vmem:[#allocation12 + $0x4] sm:$0xf]
    %v1053 = vld [vmem:[#allocation12 + $0x8] sm:$0xf]
    %v1054 = vld [vmem:[#allocation12 + $0xc] sm:$0xf]
    %v1055 = vld [vmem:[#allocation12 + $0x10] sm:$0xf]
    %v1056 = vld [vmem:[#allocation12 + $0x14] sm:$0xf]
    %v1057 = vld [vmem:[#allocation12 + $0x18] sm:$0xf]
    %v1058 = vld [vmem:[#allocation12 + $0x1c] sm:$0xf]
    %v1059 = vld [vmem:[#allocation12 + $0x20] sm:$0xf]
    %v1060 = vld [vmem:[#allocation12 + $0x24] sm:$0xf]
    %v1061 = vld [vmem:[#allocation12 + $0x28] sm:$0xf]
    %v1062 = vld [vmem:[#allocation12 + $0x2c] sm:$0xf]
    %v1063 = vld [vmem:[#allocation12 + $0x30] sm:$0xf]
    %v1064 = vld [vmem:[#allocation12 + $0x34] sm:$0xf]
    %v1065 = vld [vmem:[#allocation12 + $0x38] sm:$0xf]
    %v1066 = vld [vmem:[#allocation12 + $0x3c] sm:$0xf]
    %v1067 = vld [vmem:[%s11] sm:$0x1]
    %v1068 = vld [vmem:[%s12] sm:$0x1]
    %v1069 = vld [vmem:[%s13] sm:$0x1]
    %v1071 = vlaneseq
    %v1072 = vshrl.u32 %v1071, 7
    %v1073 = vsub.s32 0, %v1072
    %v1074 = vrot.slane %v1050, %v1073
    %v1092 = vunpack.c.l.b16 %v1018
    %v1093 = vunpack.c.l.b16 %v1019
    %v1094 = vunpack.c.l.b16 %v1020
    %v1095 = vunpack.c.l.b16 %v1021
    %v1096 = vunpack.c.l.b16 %v1022
    %v1097 = vunpack.c.l.b16 %v1023
    %v1098 = vunpack.c.l.b16 %v1024
    %v1099 = vunpack.c.l.b16 %v1025
    %v1100 = vunpack.c.l.b16 %v1026
    %v1101 = vunpack.c.l.b16 %v1027
    %v1102 = vunpack.c.l.b16 %v1028
    %v1103 = vunpack.c.l.b16 %v1029
    %v1104 = vunpack.c.l.b16 %v1030
    %v1105 = vunpack.c.l.b16 %v1031
    %v1106 = vunpack.c.l.b16 %v1032
    %v1107 = vunpack.c.l.b16 %v1033
    %v1108 = vpack.c.b16 %v1093, %v1092
    %v1109 = vpack.c.b16 %v1095, %v1094
    %v1110 = vpack.c.b16 %v1097, %v1096
    %v1111 = vpack.c.b16 %v1099, %v1098
    %v1112 = vpack.c.b16 %v1101, %v1100
    %v1113 = vpack.c.b16 %v1103, %v1102
    %v1114 = vpack.c.b16 %v1105, %v1104
    %v1115 = vpack.c.b16 %v1107, %v1106
    %v1140 = vunpack.c.l.b16 %v1034
    %v1141 = vunpack.c.l.b16 %v1035
    %v1142 = vunpack.c.l.b16 %v1036
    %v1143 = vunpack.c.l.b16 %v1037
    %v1144 = vunpack.c.l.b16 %v1038
    %v1145 = vunpack.c.l.b16 %v1039
    %v1146 = vunpack.c.l.b16 %v1040
    %v1147 = vunpack.c.l.b16 %v1041
    %v1148 = vunpack.c.l.b16 %v1042
    %v1149 = vunpack.c.l.b16 %v1043
    %v1150 = vunpack.c.l.b16 %v1044
    %v1151 = vunpack.c.l.b16 %v1045
    %v1152 = vunpack.c.l.b16 %v1046
    %v1153 = vunpack.c.l.b16 %v1047
    %v1154 = vunpack.c.l.b16 %v1048
    %v1155 = vunpack.c.l.b16 %v1049
    %v1156 = vpack.c.b16 %v1141, %v1140
    %v1157 = vpack.c.b16 %v1143, %v1142
    %v1158 = vpack.c.b16 %v1145, %v1144
    %v1159 = vpack.c.b16 %v1147, %v1146
    %v1160 = vpack.c.b16 %v1149, %v1148
    %v1161 = vpack.c.b16 %v1151, %v1150
    %v1162 = vpack.c.b16 %v1153, %v1152
    %v1163 = vpack.c.b16 %v1155, %v1154
    %1172 = vmatprep.subr.bf16.mxu0 0
    %1173 = vmatpush1.bf16.msra.mxu0 %v1156
    %1174 = vmatprep.subr.bf16.mxu0 0
    %1175 = vmatpush1.bf16.msra.mxu0 %v1157
    %1176 = vmatprep.subr.bf16.mxu0 0
    %1177 = vmatpush1.bf16.msra.mxu0 %v1158
    %1178 = vmatprep.subr.bf16.mxu0 0
    %1179 = vmatpush1.bf16.msra.mxu0 %v1159
    %1180 = vmatprep.subr.bf16.mxu0 0
    %1181 = vmatpush1.bf16.msra.mxu0 %v1160
    %1182 = vmatprep.subr.bf16.mxu0 0
    %1183 = vmatpush1.bf16.msra.mxu0 %v1161
    %1184 = vmatprep.subr.bf16.mxu0 0
    %1185 = vmatpush1.bf16.msra.mxu0 %v1162
    %1186 = vmatprep.subr.bf16.mxu0 0
    %1187 = vmatpush1.bf16.msra.mxu0 %v1163
    %1188 = vmatprep.subr.bf16.mxu0 0
    %1189 = vmatpush1.bf16.msra.mxu0 0
    %1190 = vmatprep.subr.bf16.mxu0 0
    %1191 = vmatpush1.bf16.msra.mxu0 0
    %1192 = vmatprep.subr.bf16.mxu0 0
    %1193 = vmatpush1.bf16.msra.mxu0 0
    %1194 = vmatprep.subr.bf16.mxu0 0
    %1195 = vmatpush1.bf16.msra.mxu0 0
    %1196 = vmatprep.subr.bf16.mxu0 0
    %1197 = vmatpush1.bf16.msra.mxu0 0
    %1198 = vmatprep.subr.bf16.mxu0 0
    %1199 = vmatpush1.bf16.msra.mxu0 0
    %1200 = vmatprep.subr.bf16.mxu0 0
    %1201 = vmatpush1.bf16.msra.mxu0 0
    %1202 = vmatprep.subr.bf16.mxu0 0
    %1203 = vmatpush1.bf16.msra.mxu0 0
    %1204 = vmatprep.mubr.bf16.mxu0 0
    %1205 = vmatmul.mubr.bf16.gmra.mrb[0].mxu0 %v1108
    %v1206 = vpop.f32.mrb[0].mxu0
    %v1207 = vadd.f32 %v1074, %v1206
    %v1208 = vpop.f32.mrb[0].mxu0
    %v1209 = vpop.f32.mrb[0].mxu0
    %v1210 = vadd.f32 %v1074, %v1209
    %v1211 = vpop.f32.mrb[0].mxu0
    %1212 = vmatprep.mubr.bf16.mxu0 0
    %1213 = vmatmul.mubr.bf16.gmra.mrb[0].mxu0 %v1109
    %v1214 = vpop.f32.mrb[0].mxu0
    %v1215 = vadd.f32 %v1074, %v1214
    %v1216 = vpop.f32.mrb[0].mxu0
    %v1217 = vpop.f32.mrb[0].mxu0
    %v1218 = vadd.f32 %v1074, %v1217
    %v1219 = vpop.f32.mrb[0].mxu0
    %1220 = vmatprep.mubr.bf16.mxu0 0
    %1221 = vmatmul.mubr.bf16.gmra.mrb[0].mxu0 %v1110
    %v1222 = vpop.f32.mrb[0].mxu0
    %v1223 = vadd.f32 %v1074, %v1222
    %v1224 = vpop.f32.mrb[0].mxu0
    %v1225 = vpop.f32.mrb[0].mxu0
    %v1226 = vadd.f32 %v1074, %v1225
    %v1227 = vpop.f32.mrb[0].mxu0
    %1228 = vmatprep.mubr.bf16.mxu0 0
    %1229 = vmatmul.mubr.bf16.gmra.mrb[0].mxu0 %v1111
    %v1230 = vpop.f32.mrb[0].mxu0
    %v1231 = vadd.f32 %v1074, %v1230
    %v1232 = vpop.f32.mrb[0].mxu0
    %v1233 = vpop.f32.mrb[0].mxu0
    %v1234 = vadd.f32 %v1074, %v1233
    %v1235 = vpop.f32.mrb[0].mxu0
    %1236 = vmatprep.mubr.bf16.mxu0 0
    %1237 = vmatmul.mubr.bf16.gmra.mrb[0].mxu0 %v1112
    %v1238 = vpop.f32.mrb[0].mxu0
    %v1239 = vadd.f32 %v1074, %v1238
    %v1240 = vpop.f32.mrb[0].mxu0
    %v1241 = vpop.f32.mrb[0].mxu0
    %v1242 = vadd.f32 %v1074, %v1241
    %v1243 = vpop.f32.mrb[0].mxu0
    %1244 = vmatprep.mubr.bf16.mxu0 0
    %1245 = vmatmul.mubr.bf16.gmra.mrb[0].mxu0 %v1113
    %v1246 = vpop.f32.mrb[0].mxu0
    %v1247 = vadd.f32 %v1074, %v1246
    %v1248 = vpop.f32.mrb[0].mxu0
    %v1249 = vpop.f32.mrb[0].mxu0
    %v1250 = vadd.f32 %v1074, %v1249
    %v1251 = vpop.f32.mrb[0].mxu0
    %1252 = vmatprep.mubr.bf16.mxu0 0
    %1253 = vmatmul.mubr.bf16.gmra.mrb[0].mxu0 %v1114
    %v1254 = vpop.f32.mrb[0].mxu0
    %v1255 = vadd.f32 %v1074, %v1254
    %v1256 = vpop.f32.mrb[0].mxu0
    %v1257 = vpop.f32.mrb[0].mxu0
    %v1258 = vadd.f32 %v1074, %v1257
    %v1259 = vpop.f32.mrb[0].mxu0
    %1260 = vmatprep.mubr.bf16.mxu0 0
    %1261 = vmatmul.mubr.bf16.gmra.mrb[0].mxu0 %v1115
    %v1262 = vpop.f32.mrb[0].mxu0
    %v1263 = vadd.f32 %v1074, %v1262
    %v1264 = vpop.f32.mrb[0].mxu0
    %v1265 = vpop.f32.mrb[0].mxu0
    %v1266 = vadd.f32 %v1074, %v1265
    %v1267 = vpop.f32.mrb[0].mxu0
    %1268 = vdwg.mxu0
    %v1269 = vmul.f32 %v1207, %v1207
    %v1270 = vmul.f32 %v1210, %v1210
    %v1271 = vmul.f32 %v1215, %v1215
    %v1272 = vmul.f32 %v1218, %v1218
    %v1273 = vmul.f32 %v1223, %v1223
    %v1274 = vmul.f32 %v1226, %v1226
    %v1275 = vmul.f32 %v1231, %v1231
    %v1276 = vmul.f32 %v1234, %v1234
    %v1277 = vmul.f32 %v1239, %v1239
    %v1278 = vmul.f32 %v1242, %v1242
    %v1279 = vmul.f32 %v1247, %v1247
    %v1280 = vmul.f32 %v1250, %v1250
    %v1281 = vmul.f32 %v1255, %v1255
    %v1282 = vmul.f32 %v1258, %v1258
    %v1283 = vmul.f32 %v1263, %v1263
    %v1284 = vmul.f32 %v1266, %v1266
    %v1285 = vmul.f32 %v1207, %v1269
    %v1286 = vmul.f32 %v1210, %v1270
    %v1287 = vmul.f32 %v1215, %v1271
    %v1288 = vmul.f32 %v1218, %v1272
    %v1289 = vmul.f32 %v1223, %v1273
    %v1290 = vmul.f32 %v1226, %v1274
    %v1291 = vmul.f32 %v1231, %v1275
    %v1292 = vmul.f32 %v1234, %v1276
    %v1293 = vmul.f32 %v1239, %v1277
    %v1294 = vmul.f32 %v1242, %v1278
    %v1295 = vmul.f32 %v1247, %v1279
    %v1296 = vmul.f32 %v1250, %v1280
    %v1297 = vmul.f32 %v1255, %v1281
    %v1298 = vmul.f32 %v1258, %v1282
    %v1299 = vmul.f32 %v1263, %v1283
    %v1300 = vmul.f32 %v1266, %v1284
    %v1301 = vmul.f32 %v1285, 0.044715
    %v1302 = vmul.f32 %v1286, 0.044715
    %v1303 = vmul.f32 %v1287, 0.044715
    %v1304 = vmul.f32 %v1288, 0.044715
    %v1305 = vmul.f32 %v1289, 0.044715
    %v1306 = vmul.f32 %v1290, 0.044715
    %v1307 = vmul.f32 %v1291, 0.044715
    %v1308 = vmul.f32 %v1292, 0.044715
    %v1309 = vmul.f32 %v1293, 0.044715
    %v1310 = vmul.f32 %v1294, 0.044715
    %v1311 = vmul.f32 %v1295, 0.044715
    %v1312 = vmul.f32 %v1296, 0.044715
    %v1313 = vmul.f32 %v1297, 0.044715
    %v1314 = vmul.f32 %v1298, 0.044715
    %v1315 = vmul.f32 %v1299, 0.044715
    %v1316 = vmul.f32 %v1300, 0.044715
    %v1317 = vadd.f32 %v1207, %v1301
    %v1318 = vadd.f32 %v1210, %v1302
    %v1319 = vadd.f32 %v1215, %v1303
    %v1320 = vadd.f32 %v1218, %v1304
    %v1321 = vadd.f32 %v1223, %v1305
    %v1322 = vadd.f32 %v1226, %v1306
    %v1323 = vadd.f32 %v1231, %v1307
    %v1324 = vadd.f32 %v1234, %v1308
    %v1325 = vadd.f32 %v1239, %v1309
    %v1326 = vadd.f32 %v1242, %v1310
    %v1327 = vadd.f32 %v1247, %v1311
    %v1328 = vadd.f32 %v1250, %v1312
    %v1329 = vadd.f32 %v1255, %v1313
    %v1330 = vadd.f32 %v1258, %v1314
    %v1331 = vadd.f32 %v1263, %v1315
    %v1332 = vadd.f32 %v1266, %v1316
    %v1333 = vmul.f32 %v1317, 0.7978846
    %v1334 = vmul.f32 %v1318, 0.7978846
    %v1335 = vmul.f32 %v1319, 0.7978846
    %v1336 = vmul.f32 %v1320, 0.7978846
    %v1337 = vmul.f32 %v1321, 0.7978846
    %v1338 = vmul.f32 %v1322, 0.7978846
    %v1339 = vmul.f32 %v1323, 0.7978846
    %v1340 = vmul.f32 %v1324, 0.7978846
    %v1341 = vmul.f32 %v1325, 0.7978846
    %v1342 = vmul.f32 %v1326, 0.7978846
    %v1343 = vmul.f32 %v1327, 0.7978846
    %v1344 = vmul.f32 %v1328, 0.7978846
    %v1345 = vmul.f32 %v1329, 0.7978846
    %v1346 = vmul.f32 %v1330, 0.7978846
    %v1347 = vmul.f32 %v1331, 0.7978846
    %v1348 = vmul.f32 %v1332, 0.7978846
    %v1349 = vtanh.pop %v1333
    %v1350 = vtanh.pop %v1334
    %v1351 = vtanh.pop %v1335
    %v1352 = vtanh.pop %v1336
    %v1353 = vtanh.pop %v1337
    %v1354 = vtanh.pop %v1338
    %v1355 = vtanh.pop %v1339
    %v1356 = vtanh.pop %v1340
    %v1357 = vtanh.pop %v1341
    %v1358 = vtanh.pop %v1342
    %v1359 = vtanh.pop %v1343
    %v1360 = vtanh.pop %v1344
    %v1361 = vtanh.pop %v1345
    %v1362 = vtanh.pop %v1346
    %v1363 = vtanh.pop %v1347
    %v1364 = vtanh.pop %v1348
    %v1365 = vadd.f32 %v1349, 1.0
    %v1366 = vadd.f32 %v1350, 1.0
    %v1367 = vadd.f32 %v1351, 1.0
    %v1368 = vadd.f32 %v1352, 1.0
    %v1369 = vadd.f32 %v1353, 1.0
    %v1370 = vadd.f32 %v1354, 1.0
    %v1371 = vadd.f32 %v1355, 1.0
    %v1372 = vadd.f32 %v1356, 1.0
    %v1373 = vadd.f32 %v1357, 1.0
    %v1374 = vadd.f32 %v1358, 1.0
    %v1375 = vadd.f32 %v1359, 1.0
    %v1376 = vadd.f32 %v1360, 1.0
    %v1377 = vadd.f32 %v1361, 1.0
    %v1378 = vadd.f32 %v1362, 1.0
    %v1379 = vadd.f32 %v1363, 1.0
    %v1380 = vadd.f32 %v1364, 1.0
    %v1381 = vmul.f32 %v1365, 0.5
    %v1382 = vmul.f32 %v1366, 0.5
    %v1383 = vmul.f32 %v1367, 0.5
    %v1384 = vmul.f32 %v1368, 0.5
    %v1385 = vmul.f32 %v1369, 0.5
    %v1386 = vmul.f32 %v1370, 0.5
    %v1387 = vmul.f32 %v1371, 0.5
    %v1388 = vmul.f32 %v1372, 0.5
    %v1389 = vmul.f32 %v1373, 0.5
    %v1390 = vmul.f32 %v1374, 0.5
    %v1391 = vmul.f32 %v1375, 0.5
    %v1392 = vmul.f32 %v1376, 0.5
    %v1393 = vmul.f32 %v1377, 0.5
    %v1394 = vmul.f32 %v1378, 0.5
    %v1395 = vmul.f32 %v1379, 0.5
    %v1396 = vmul.f32 %v1380, 0.5
    %v1397 = vmul.f32 %v1207, %v1381
    %v1398 = vmul.f32 %v1210, %v1382
    %v1399 = vmul.f32 %v1215, %v1383
    %v1400 = vmul.f32 %v1218, %v1384
    %v1401 = vmul.f32 %v1223, %v1385
    %v1402 = vmul.f32 %v1226, %v1386
    %v1403 = vmul.f32 %v1231, %v1387
    %v1404 = vmul.f32 %v1234, %v1388
    %v1405 = vmul.f32 %v1239, %v1389
    %v1406 = vmul.f32 %v1242, %v1390
    %v1407 = vmul.f32 %v1247, %v1391
    %v1408 = vmul.f32 %v1250, %v1392
    %v1409 = vmul.f32 %v1255, %v1393
    %v1410 = vmul.f32 %v1258, %v1394
    %v1411 = vmul.f32 %v1263, %v1395
    %v1412 = vmul.f32 %v1266, %v1396
    %v1413 = vpack.c.bf16 %v1398, %v1397
    %v1414 = vpack.c.bf16 %v1400, %v1399
    %v1415 = vpack.c.bf16 %v1402, %v1401
    %v1416 = vpack.c.bf16 %v1404, %v1403
    %v1417 = vpack.c.bf16 %v1406, %v1405
    %v1418 = vpack.c.bf16 %v1408, %v1407
    %v1419 = vpack.c.bf16 %v1410, %v1409
    %v1420 = vpack.c.bf16 %v1412, %v1411
    %v1422 = vlaneseq
    %v1423 = vshrl.u32 %v1422, 7
    %v1424 = vsub.s32 0, %v1423
    %v1425 = vrot.slane %v1067, %v1424
    %v1443 = vunpack.c.l.b16 %v1051
    %v1444 = vunpack.c.l.b16 %v1052
    %v1445 = vunpack.c.l.b16 %v1053
    %v1446 = vunpack.c.l.b16 %v1054
    %v1447 = vunpack.c.l.b16 %v1055
    %v1448 = vunpack.c.l.b16 %v1056
    %v1449 = vunpack.c.l.b16 %v1057
    %v1450 = vunpack.c.l.b16 %v1058
    %v1451 = vunpack.c.l.b16 %v1059
    %v1452 = vunpack.c.l.b16 %v1060
    %v1453 = vunpack.c.l.b16 %v1061
    %v1454 = vunpack.c.l.b16 %v1062
    %v1455 = vunpack.c.l.b16 %v1063
    %v1456 = vunpack.c.l.b16 %v1064
    %v1457 = vunpack.c.l.b16 %v1065
    %v1458 = vunpack.c.l.b16 %v1066
    %v1459 = vpack.c.b16 %v1444, %v1443
    %v1460 = vpack.c.b16 %v1446, %v1445
    %v1461 = vpack.c.b16 %v1448, %v1447
    %v1462 = vpack.c.b16 %v1450, %v1449
    %v1463 = vpack.c.b16 %v1452, %v1451
    %v1464 = vpack.c.b16 %v1454, %v1453
    %v1465 = vpack.c.b16 %v1456, %v1455
    %v1466 = vpack.c.b16 %v1458, %v1457
    %1475 = vmatprep.subr.bf16.mxu0 0
    %1476 = vmatpush1.bf16.msra.mxu0 %v1459
    %1477 = vmatprep.subr.bf16.mxu0 0
    %1478 = vmatpush1.bf16.msra.mxu0 %v1460
    %1479 = vmatprep.subr.bf16.mxu0 0
    %1480 = vmatpush1.bf16.msra.mxu0 %v1461
    %1481 = vmatprep.subr.bf16.mxu0 0
    %1482 = vmatpush1.bf16.msra.mxu0 %v1462
    %1483 = vmatprep.subr.bf16.mxu0 0
    %1484 = vmatpush1.bf16.msra.mxu0 %v1463
    %1485 = vmatprep.subr.bf16.mxu0 0
    %1486 = vmatpush1.bf16.msra.mxu0 %v1464
    %1487 = vmatprep.subr.bf16.mxu0 0
    %1488 = vmatpush1.bf16.msra.mxu0 %v1465
    %1489 = vmatprep.subr.bf16.mxu0 0
    %1490 = vmatpush1.bf16.msra.mxu0 %v1466
    %1491 = vmatprep.subr.bf16.mxu0 0
    %1492 = vmatpush1.bf16.msra.mxu0 0
    %1493 = vmatprep.subr.bf16.mxu0 0
    %1494 = vmatpush1.bf16.msra.mxu0 0
    %1495 = vmatprep.subr.bf16.mxu0 0
    %1496 = vmatpush1.bf16.msra.mxu0 0
    %1497 = vmatprep.subr.bf16.mxu0 0
    %1498 = vmatpush1.bf16.msra.mxu0 0
    %1499 = vmatprep.subr.bf16.mxu0 0
    %1500 = vmatpush1.bf16.msra.mxu0 0
    %1501 = vmatprep.subr.bf16.mxu0 0
    %1502 = vmatpush1.bf16.msra.mxu0 0
    %1503 = vmatprep.subr.bf16.mxu0 0
    %1504 = vmatpush1.bf16.msra.mxu0 0
    %1505 = vmatprep.subr.bf16.mxu0 0
    %1506 = vmatpush1.bf16.msra.mxu0 0
    %1507 = vmatprep.mubr.bf16.mxu0 0
    %1508 = vmatmul.mubr.bf16.gmra.mrb[0].mxu0 %v1413
    %v1509 = vpop.f32.mrb[0].mxu0
    %v1510 = vadd.f32 %v1425, %v1509
    %v1511 = vpop.f32.mrb[0].mxu0
    %v1512 = vpop.f32.mrb[0].mxu0
    %v1513 = vadd.f32 %v1425, %v1512
    %v1514 = vpop.f32.mrb[0].mxu0
    %1515 = vmatprep.mubr.bf16.mxu0 0
    %1516 = vmatmul.mubr.bf16.gmra.mrb[0].mxu0 %v1414
    %v1517 = vpop.f32.mrb[0].mxu0
    %v1518 = vadd.f32 %v1425, %v1517
    %v1519 = vpop.f32.mrb[0].mxu0
    %v1520 = vpop.f32.mrb[0].mxu0
    %v1521 = vadd.f32 %v1425, %v1520
    %v1522 = vpop.f32.mrb[0].mxu0
    %1523 = vmatprep.mubr.bf16.mxu0 0
    %1524 = vmatmul.mubr.bf16.gmra.mrb[0].mxu0 %v1415
    %v1525 = vpop.f32.mrb[0].mxu0
    %v1526 = vadd.f32 %v1425, %v1525
    %v1527 = vpop.f32.mrb[0].mxu0
    %v1528 = vpop.f32.mrb[0].mxu0
    %v1529 = vadd.f32 %v1425, %v1528
    %v1530 = vpop.f32.mrb[0].mxu0
    %1531 = vmatprep.mubr.bf16.mxu0 0
    %1532 = vmatmul.mubr.bf16.gmra.mrb[0].mxu0 %v1416
    %v1533 = vpop.f32.mrb[0].mxu0
    %v1534 = vadd.f32 %v1425, %v1533
    %v1535 = vpop.f32.mrb[0].mxu0
    %v1536 = vpop.f32.mrb[0].mxu0
    %v1537 = vadd.f32 %v1425, %v1536
    %v1538 = vpop.f32.mrb[0].mxu0
    %1539 = vmatprep.mubr.bf16.mxu0 0
    %1540 = vmatmul.mubr.bf16.gmra.mrb[0].mxu0 %v1417
    %v1541 = vpop.f32.mrb[0].mxu0
    %v1542 = vadd.f32 %v1425, %v1541
    %v1543 = vpop.f32.mrb[0].mxu0
    %v1544 = vpop.f32.mrb[0].mxu0
    %v1545 = vadd.f32 %v1425, %v1544
    %v1546 = vpop.f32.mrb[0].mxu0
    %1547 = vmatprep.mubr.bf16.mxu0 0
    %1548 = vmatmul.mubr.bf16.gmra.mrb[0].mxu0 %v1418
    %v1549 = vpop.f32.mrb[0].mxu0
    %v1550 = vadd.f32 %v1425, %v1549
    %v1551 = vpop.f32.mrb[0].mxu0
    %v1552 = vpop.f32.mrb[0].mxu0
    %v1553 = vadd.f32 %v1425, %v1552
    %v1554 = vpop.f32.mrb[0].mxu0
    %1555 = vmatprep.mubr.bf16.mxu0 0
    %1556 = vmatmul.mubr.bf16.gmra.mrb[0].mxu0 %v1419
    %v1557 = vpop.f32.mrb[0].mxu0
    %v1558 = vadd.f32 %v1425, %v1557
    %v1559 = vpop.f32.mrb[0].mxu0
    %v1560 = vpop.f32.mrb[0].mxu0
    %v1561 = vadd.f32 %v1425, %v1560
    %v1562 = vpop.f32.mrb[0].mxu0
    %1563 = vmatprep.mubr.bf16.mxu0 0
    %1564 = vmatmul.mubr.bf16.gmra.mrb[0].mxu0 %v1420
    %v1565 = vpop.f32.mrb[0].mxu0
    %v1566 = vadd.f32 %v1425, %v1565
    %v1567 = vpop.f32.mrb[0].mxu0
    %v1568 = vpop.f32.mrb[0].mxu0
    %v1569 = vadd.f32 %v1425, %v1568
    %v1570 = vpop.f32.mrb[0].mxu0
    %1571 = vdwg.mxu0
    %v1572 = vadd.f32 %v1510, %v1207
    %v1573 = vadd.f32 %v1513, %v1210
    %v1574 = vadd.f32 %v1518, %v1215
    %v1575 = vadd.f32 %v1521, %v1218
    %v1576 = vadd.f32 %v1526, %v1223
    %v1577 = vadd.f32 %v1529, %v1226
    %v1578 = vadd.f32 %v1534, %v1231
    %v1579 = vadd.f32 %v1537, %v1234
    %v1580 = vadd.f32 %v1542, %v1239
    %v1581 = vadd.f32 %v1545, %v1242
    %v1582 = vadd.f32 %v1550, %v1247
    %v1583 = vadd.f32 %v1553, %v1250
    %v1584 = vadd.f32 %v1558, %v1255
    %v1585 = vadd.f32 %v1561, %v1258
    %v1586 = vadd.f32 %v1566, %v1263
    %v1587 = vadd.f32 %v1569, %v1266
    %1588 = vadd.xlane.f32.xlu0 %v1572
    %v1589 = vpop.xlane.xlu0 %1588
    %1590 = vadd.xlane.f32.xlu0 %v1573
    %v1591 = vpop.xlane.xlu0 %1590
    %1592 = vadd.xlane.f32.xlu0 %v1574
    %v1593 = vpop.xlane.xlu0 %1592
    %1594 = vadd.xlane.f32.xlu0 %v1575
    %v1595 = vpop.xlane.xlu0 %1594
    %1596 = vadd.xlane.f32.xlu0 %v1576
    %v1597 = vpop.xlane.xlu0 %1596
    %1598 = vadd.xlane.f32.xlu0 %v1577
    %v1599 = vpop.xlane.xlu0 %1598
    %1600 = vadd.xlane.f32.xlu0 %v1578
    %v1601 = vpop.xlane.xlu0 %1600
    %1602 = vadd.xlane.f32.xlu0 %v1579
    %v1603 = vpop.xlane.xlu0 %1602
    %1604 = vadd.xlane.f32.xlu0 %v1580
    %v1605 = vpop.xlane.xlu0 %1604
    %1606 = vadd.xlane.f32.xlu0 %v1581
    %v1607 = vpop.xlane.xlu0 %1606
    %1608 = vadd.xlane.f32.xlu0 %v1582
    %v1609 = vpop.xlane.xlu0 %1608
    %1610 = vadd.xlane.f32.xlu0 %v1583
    %v1611 = vpop.xlane.xlu0 %1610
    %1612 = vadd.xlane.f32.xlu0 %v1584
    %v1613 = vpop.xlane.xlu0 %1612
    %1614 = vadd.xlane.f32.xlu0 %v1585
    %v1615 = vpop.xlane.xlu0 %1614
    %1616 = vadd.xlane.f32.xlu0 %v1586
    %v1617 = vpop.xlane.xlu0 %1616
    %1618 = vadd.xlane.f32.xlu0 %v1587
    %v1619 = vpop.xlane.xlu0 %1618
    %v1620 = vmul.f32 %v1589, %v829
    %v1621 = vmul.f32 %v1591, %v829
    %v1622 = vmul.f32 %v1593, %v829
    %v1623 = vmul.f32 %v1595, %v829
    %v1624 = vmul.f32 %v1597, %v829
    %v1625 = vmul.f32 %v1599, %v829
    %v1626 = vmul.f32 %v1601, %v829
    %v1627 = vmul.f32 %v1603, %v829
    %v1628 = vmul.f32 %v1605, %v829
    %v1629 = vmul.f32 %v1607, %v829
    %v1630 = vmul.f32 %v1609, %v829
    %v1631 = vmul.f32 %v1611, %v829
    %v1632 = vmul.f32 %v1613, %v829
    %v1633 = vmul.f32 %v1615, %v829
    %v1634 = vmul.f32 %v1617, %v829
    %v1635 = vmul.f32 %v1619, %v829
    %v1636 = vsub.f32 %v1572, %v1620
    %v1637 = vsub.f32 %v1573, %v1621
    %v1638 = vsub.f32 %v1574, %v1622
    %v1639 = vsub.f32 %v1575, %v1623
    %v1640 = vsub.f32 %v1576, %v1624
    %v1641 = vsub.f32 %v1577, %v1625
    %v1642 = vsub.f32 %v1578, %v1626
    %v1643 = vsub.f32 %v1579, %v1627
    %v1644 = vsub.f32 %v1580, %v1628
    %v1645 = vsub.f32 %v1581, %v1629
    %v1646 = vsub.f32 %v1582, %v1630
    %v1647 = vsub.f32 %v1583, %v1631
    %v1648 = vsub.f32 %v1584, %v1632
    %v1649 = vsub.f32 %v1585, %v1633
    %v1650 = vsub.f32 %v1586, %v1634
    %v1651 = vsub.f32 %v1587, %v1635
    %v1652 = vmul.f32 %v1636, %v1636
    %v1653 = vmul.f32 %v1637, %v1637
    %v1654 = vmul.f32 %v1638, %v1638
    %v1655 = vmul.f32 %v1639, %v1639
    %v1656 = vmul.f32 %v1640, %v1640
    %v1657 = vmul.f32 %v1641, %v1641
    %v1658 = vmul.f32 %v1642, %v1642
    %v1659 = vmul.f32 %v1643, %v1643
    %v1660 = vmul.f32 %v1644, %v1644
    %v1661 = vmul.f32 %v1645, %v1645
    %v1662 = vmul.f32 %v1646, %v1646
    %v1663 = vmul.f32 %v1647, %v1647
    %v1664 = vmul.f32 %v1648, %v1648
    %v1665 = vmul.f32 %v1649, %v1649
    %v1666 = vmul.f32 %v1650, %v1650
    %v1667 = vmul.f32 %v1651, %v1651
    %1668 = vadd.xlane.f32.xlu0 %v1652
    %v1669 = vpop.xlane.xlu0 %1668
    %1670 = vadd.xlane.f32.xlu0 %v1653
    %v1671 = vpop.xlane.xlu0 %1670
    %1672 = vadd.xlane.f32.xlu0 %v1654
    %v1673 = vpop.xlane.xlu0 %1672
    %1674 = vadd.xlane.f32.xlu0 %v1655
    %v1675 = vpop.xlane.xlu0 %1674
    %1676 = vadd.xlane.f32.xlu0 %v1656
    %v1677 = vpop.xlane.xlu0 %1676
    %1678 = vadd.xlane.f32.xlu0 %v1657
    %v1679 = vpop.xlane.xlu0 %1678
    %1680 = vadd.xlane.f32.xlu0 %v1658
    %v1681 = vpop.xlane.xlu0 %1680
    %1682 = vadd.xlane.f32.xlu0 %v1659
    %v1683 = vpop.xlane.xlu0 %1682
    %1684 = vadd.xlane.f32.xlu0 %v1660
    %v1685 = vpop.xlane.xlu0 %1684
    %1686 = vadd.xlane.f32.xlu0 %v1661
    %v1687 = vpop.xlane.xlu0 %1686
    %1688 = vadd.xlane.f32.xlu0 %v1662
    %v1689 = vpop.xlane.xlu0 %1688
    %1690 = vadd.xlane.f32.xlu0 %v1663
    %v1691 = vpop.xlane.xlu0 %1690
    %1692 = vadd.xlane.f32.xlu0 %v1664
    %v1693 = vpop.xlane.xlu0 %1692
    %1694 = vadd.xlane.f32.xlu0 %v1665
    %v1695 = vpop.xlane.xlu0 %1694
    %1696 = vadd.xlane.f32.xlu0 %v1666
    %v1697 = vpop.xlane.xlu0 %1696
    %1698 = vadd.xlane.f32.xlu0 %v1667
    %v1699 = vpop.xlane.xlu0 %1698
    %v1700 = vmul.f32 %v1669, %v829
    %v1701 = vmul.f32 %v1671, %v829
    %v1702 = vmul.f32 %v1673, %v829
    %v1703 = vmul.f32 %v1675, %v829
    %v1704 = vmul.f32 %v1677, %v829
    %v1705 = vmul.f32 %v1679, %v829
    %v1706 = vmul.f32 %v1681, %v829
    %v1707 = vmul.f32 %v1683, %v829
    %v1708 = vmul.f32 %v1685, %v829
    %v1709 = vmul.f32 %v1687, %v829
    %v1710 = vmul.f32 %v1689, %v829
    %v1711 = vmul.f32 %v1691, %v829
    %v1712 = vmul.f32 %v1693, %v829
    %v1713 = vmul.f32 %v1695, %v829
    %v1714 = vmul.f32 %v1697, %v829
    %v1715 = vmul.f32 %v1699, %v829
    %v1716 = vadd.f32 %v1700, 1e-05
    %v1717 = vadd.f32 %v1701, 1e-05
    %v1718 = vadd.f32 %v1702, 1e-05
    %v1719 = vadd.f32 %v1703, 1e-05
    %v1720 = vadd.f32 %v1704, 1e-05
    %v1721 = vadd.f32 %v1705, 1e-05
    %v1722 = vadd.f32 %v1706, 1e-05
    %v1723 = vadd.f32 %v1707, 1e-05
    %v1724 = vadd.f32 %v1708, 1e-05
    %v1725 = vadd.f32 %v1709, 1e-05
    %v1726 = vadd.f32 %v1710, 1e-05
    %v1727 = vadd.f32 %v1711, 1e-05
    %v1728 = vadd.f32 %v1712, 1e-05
    %v1729 = vadd.f32 %v1713, 1e-05
    %v1730 = vadd.f32 %v1714, 1e-05
    %v1731 = vadd.f32 %v1715, 1e-05
    %v1732 = vrsqrt.pop %v1716
    %v1733 = vrsqrt.pop %v1717
    %v1734 = vrsqrt.pop %v1718
    %v1735 = vrsqrt.pop %v1719
    %v1736 = vrsqrt.pop %v1720
    %v1737 = vrsqrt.pop %v1721
    %v1738 = vrsqrt.pop %v1722
    %v1739 = vrsqrt.pop %v1723
    %v1740 = vrsqrt.pop %v1724
    %v1741 = vrsqrt.pop %v1725
    %v1742 = vrsqrt.pop %v1726
    %v1743 = vrsqrt.pop %v1727
    %v1744 = vrsqrt.pop %v1728
    %v1745 = vrsqrt.pop %v1729
    %v1746 = vrsqrt.pop %v1730
    %v1747 = vrsqrt.pop %v1731
    %v1748 = vmul.f32 %v1636, %v1732
    %v1749 = vmul.f32 %v1637, %v1733
    %v1750 = vmul.f32 %v1638, %v1734
    %v1751 = vmul.f32 %v1639, %v1735
    %v1752 = vmul.f32 %v1640, %v1736
    %v1753 = vmul.f32 %v1641, %v1737
    %v1754 = vmul.f32 %v1642, %v1738
    %v1755 = vmul.f32 %v1643, %v1739
    %v1756 = vmul.f32 %v1644, %v1740
    %v1757 = vmul.f32 %v1645, %v1741
    %v1758 = vmul.f32 %v1646, %v1742
    %v1759 = vmul.f32 %v1647, %v1743
    %v1760 = vmul.f32 %v1648, %v1744
    %v1761 = vmul.f32 %v1649, %v1745
    %v1762 = vmul.f32 %v1650, %v1746
    %v1763 = vmul.f32 %v1651, %v1747
    %v1765 = vlaneseq
    %v1766 = vshrl.u32 %v1765, 7
    %v1767 = vsub.s32 0, %v1766
    %v1768 = vrot.slane %v1068, %v1767
    %v1770 = vmul.f32 %v1748, %v1768
    %v1771 = vmul.f32 %v1749, %v1768
    %v1772 = vmul.f32 %v1750, %v1768
    %v1773 = vmul.f32 %v1751, %v1768
    %v1774 = vmul.f32 %v1752, %v1768
    %v1775 = vmul.f32 %v1753, %v1768
    %v1776 = vmul.f32 %v1754, %v1768
    %v1777 = vmul.f32 %v1755, %v1768
    %v1778 = vmul.f32 %v1756, %v1768
    %v1779 = vmul.f32 %v1757, %v1768
    %v1780 = vmul.f32 %v1758, %v1768
    %v1781 = vmul.f32 %v1759, %v1768
    %v1782 = vmul.f32 %v1760, %v1768
    %v1783 = vmul.f32 %v1761, %v1768
    %v1784 = vmul.f32 %v1762, %v1768
    %v1785 = vmul.f32 %v1763, %v1768
    %v1787 = vlaneseq
    %v1788 = vshrl.u32 %v1787, 7
    %v1789 = vsub.s32 0, %v1788
    %v1790 = vrot.slane %v1069, %v1789
    %v1792 = vadd.f32 %v1770, %v1790
    %v1793 = vadd.f32 %v1771, %v1790
    %v1794 = vadd.f32 %v1772, %v1790
    %v1795 = vadd.f32 %v1773, %v1790
    %v1796 = vadd.f32 %v1774, %v1790
    %v1797 = vadd.f32 %v1775, %v1790
    %v1798 = vadd.f32 %v1776, %v1790
    %v1799 = vadd.f32 %v1777, %v1790
    %v1800 = vadd.f32 %v1778, %v1790
    %v1801 = vadd.f32 %v1779, %v1790
    %v1802 = vadd.f32 %v1780, %v1790
    %v1803 = vadd.f32 %v1781, %v1790
    %v1804 = vadd.f32 %v1782, %v1790
    %v1805 = vadd.f32 %v1783, %v1790
    %v1806 = vadd.f32 %v1784, %v1790
    %v1807 = vadd.f32 %v1785, %v1790
    %v1808 = vpack.c.bf16 %v1793, %v1792
    %v1809 = vpack.c.bf16 %v1795, %v1794
    %v1810 = vpack.c.bf16 %v1797, %v1796
    %v1811 = vpack.c.bf16 %v1799, %v1798
    %v1812 = vpack.c.bf16 %v1801, %v1800
    %v1813 = vpack.c.bf16 %v1803, %v1802
    %v1814 = vpack.c.bf16 %v1805, %v1804
    %v1815 = vpack.c.bf16 %v1807, %v1806
    %1816 = vst [vmem:[#allocation2] sm:$0xff] %v1808
    %1817 = vst [vmem:[#allocation2 + $0x8] sm:$0xff] %v1809
    %1818 = vst [vmem:[#allocation2 + $0x10] sm:$0xff] %v1810
    %1819 = vst [vmem:[#allocation2 + $0x18] sm:$0xff] %v1811
    %1820 = vst [vmem:[#allocation2 + $0x20] sm:$0xff] %v1812
    %1821 = vst [vmem:[#allocation2 + $0x28] sm:$0xff] %v1813
    %1822 = vst [vmem:[#allocation2 + $0x30] sm:$0xff] %v1814
    %1823 = vst [vmem:[#allocation2 + $0x38] sm:$0xff] %v1815
    %v1824 = vpack.c.bf16 %v1003, %v1002
    %v1825 = vpack.c.bf16 %v1005, %v1004
    %v1826 = vpack.c.bf16 %v1007, %v1006
    %v1827 = vpack.c.bf16 %v1009, %v1008
    %v1828 = vpack.c.bf16 %v1011, %v1010
    %v1829 = vpack.c.bf16 %v1013, %v1012
    %v1830 = vpack.c.bf16 %v1015, %v1014
    %v1831 = vpack.c.bf16 %v1017, %v1016
    %1832 = vst [vmem:[#allocation2 + $0x40] sm:$0xff] %v1824
    %1833 = vst [vmem:[#allocation2 + $0x48] sm:$0xff] %v1825
    %1834 = vst [vmem:[#allocation2 + $0x50] sm:$0xff] %v1826
    %1835 = vst [vmem:[#allocation2 + $0x58] sm:$0xff] %v1827
    %1836 = vst [vmem:[#allocation2 + $0x60] sm:$0xff] %v1828
    %1837 = vst [vmem:[#allocation2 + $0x68] sm:$0xff] %v1829
    %1838 = vst [vmem:[#allocation2 + $0x70] sm:$0xff] %v1830
    %1839 = vst [vmem:[#allocation2 + $0x78] sm:$0xff] %v1831
    %v1840 = vld [vmem:[#allocation2] sm:$0xff]
    %v1841 = vld [vmem:[#allocation2 + $0x8] sm:$0xff]
    %v1842 = vld [vmem:[#allocation2 + $0x10] sm:$0xff]
    %v1843 = vld [vmem:[#allocation2 + $0x18] sm:$0xff]
    %v1844 = vld [vmem:[#allocation2 + $0x20] sm:$0xff]
    %v1845 = vld [vmem:[#allocation2 + $0x28] sm:$0xff]
    %v1846 = vld [vmem:[#allocation2 + $0x30] sm:$0xff]
    %v1847 = vld [vmem:[#allocation2 + $0x38] sm:$0xff]
    %v1848 = vld [vmem:[#allocation2 + $0x40] sm:$0xff]
    %v1849 = vld [vmem:[#allocation2 + $0x48] sm:$0xff]
    %v1850 = vld [vmem:[#allocation2 + $0x50] sm:$0xff]
    %v1851 = vld [vmem:[#allocation2 + $0x58] sm:$0xff]
    %v1852 = vld [vmem:[#allocation2 + $0x60] sm:$0xff]
    %v1853 = vld [vmem:[#allocation2 + $0x68] sm:$0xff]
    %v1854 = vld [vmem:[#allocation2 + $0x70] sm:$0xff]
    %v1855 = vld [vmem:[#allocation2 + $0x78] sm:$0xff]
    %1856 = vmatprep.subr.bf16.mxu0 0
    %1857 = vmatpush1.bf16.xpose.msra.mxu0 %v1840
    %1858 = vmatprep.subr.bf16.mxu0 0
    %1859 = vmatpush1.bf16.xpose.msra.mxu0 %v1841
    %1860 = vmatprep.subr.bf16.mxu0 0
    %1861 = vmatpush1.bf16.xpose.msra.mxu0 %v1842
    %1862 = vmatprep.subr.bf16.mxu0 0
    %1863 = vmatpush1.bf16.xpose.msra.mxu0 %v1843
    %1864 = vmatprep.subr.bf16.mxu0 0
    %1865 = vmatpush1.bf16.xpose.msra.mxu0 %v1844
    %1866 = vmatprep.subr.bf16.mxu0 0
    %1867 = vmatpush1.bf16.xpose.msra.mxu0 %v1845
    %1868 = vmatprep.subr.bf16.mxu0 0
    %1869 = vmatpush1.bf16.xpose.msra.mxu0 %v1846
    %1870 = vmatprep.subr.bf16.mxu0 0
    %1871 = vmatpush1.bf16.xpose.msra.mxu0 %v1847
    %1872 = vmatprep.subr.bf16.mxu0 0
    %1873 = vmatpush1.bf16.xpose.msra.mxu0 %v1848
    %1874 = vmatprep.subr.bf16.mxu0 0
    %1875 = vmatpush1.bf16.xpose.msra.mxu0 %v1849
    %1876 = vmatprep.subr.bf16.mxu0 0
    %1877 = vmatpush1.bf16.xpose.msra.mxu0 %v1850
    %1878 = vmatprep.subr.bf16.mxu0 0
    %1879 = vmatpush1.bf16.xpose.msra.mxu0 %v1851
    %1880 = vmatprep.subr.bf16.mxu0 0
    %1881 = vmatpush1.bf16.xpose.msra.mxu0 %v1852
    %1882 = vmatprep.subr.bf16.mxu0 0
    %1883 = vmatpush1.bf16.xpose.msra.mxu0 %v1853
    %1884 = vmatprep.subr.bf16.mxu0 0
    %1885 = vmatpush1.bf16.xpose.msra.mxu0 %v1854
    %1886 = vmatprep.subr.bf16.mxu0 0
    %1887 = vmatpush1.bf16.xpose.msra.mxu0 %v1855
    %1888 = vmatprep.mubr.bf16.mxu0 0
    %1889 = vmatmul.mubr.bf16.gmra.mrb[0].mxu0 %v1840
    %v1890 = vpop.f32.mrb[0].mxu0
    %v1891 = vadd.f32 0.0, %v1890
    %v1892 = vpop.f32.mrb[0].mxu0
    %v1893 = vadd.f32 0.0, %v1892
    %v1894 = vpop.f32.mrb[0].mxu0
    %v1895 = vadd.f32 0.0, %v1894
    %v1896 = vpop.f32.mrb[0].mxu0
    %v1897 = vadd.f32 0.0, %v1896
    %1898 = vmatprep.mubr.bf16.mxu0 0
    %1899 = vmatmul.mubr.bf16.gmra.mrb[0].mxu0 %v1841
    %v1900 = vpop.f32.mrb[0].mxu0
    %v1901 = vadd.f32 0.0, %v1900
    %v1902 = vpop.f32.mrb[0].mxu0
    %v1903 = vadd.f32 0.0, %v1902
    %v1904 = vpop.f32.mrb[0].mxu0
    %v1905 = vadd.f32 0.0, %v1904
    %v1906 = vpop.f32.mrb[0].mxu0
    %v1907 = vadd.f32 0.0, %v1906
    %1908 = vmatprep.mubr.bf16.mxu0 0
    %1909 = vmatmul.mubr.bf16.gmra.mrb[0].mxu0 %v1842
    %v1910 = vpop.f32.mrb[0].mxu0
    %v1911 = vadd.f32 0.0, %v1910
    %v1912 = vpop.f32.mrb[0].mxu0
    %v1913 = vadd.f32 0.0, %v1912
    %v1914 = vpop.f32.mrb[0].mxu0
    %v1915 = vadd.f32 0.0, %v1914
    %v1916 = vpop.f32.mrb[0].mxu0
    %v1917 = vadd.f32 0.0, %v1916
    %1918 = vmatprep.mubr.bf16.mxu0 0
    %1919 = vmatmul.mubr.bf16.gmra.mrb[0].mxu0 %v1843
    %v1920 = vpop.f32.mrb[0].mxu0
    %v1921 = vadd.f32 0.0, %v1920
    %v1922 = vpop.f32.mrb[0].mxu0
    %v1923 = vadd.f32 0.0, %v1922
    %v1924 = vpop.f32.mrb[0].mxu0
    %v1925 = vadd.f32 0.0, %v1924
    %v1926 = vpop.f32.mrb[0].mxu0
    %v1927 = vadd.f32 0.0, %v1926
    %1928 = vmatprep.mubr.bf16.mxu0 0
    %1929 = vmatmul.mubr.bf16.gmra.mrb[0].mxu0 %v1844
    %v1930 = vpop.f32.mrb[0].mxu0
    %v1931 = vadd.f32 0.0, %v1930
    %v1932 = vpop.f32.mrb[0].mxu0
    %v1933 = vadd.f32 0.0, %v1932
    %v1934 = vpop.f32.mrb[0].mxu0
    %v1935 = vadd.f32 0.0, %v1934
    %v1936 = vpop.f32.mrb[0].mxu0
    %v1937 = vadd.f32 0.0, %v1936
    %1938 = vmatprep.mubr.bf16.mxu0 0
    %1939 = vmatmul.mubr.bf16.gmra.mrb[0].mxu0 %v1845
    %v1940 = vpop.f32.mrb[0].mxu0
    %v1941 = vadd.f32 0.0, %v1940
    %v1942 = vpop.f32.mrb[0].mxu0
    %v1943 = vadd.f32 0.0, %v1942
    %v1944 = vpop.f32.mrb[0].mxu0
    %v1945 = vadd.f32 0.0, %v1944
    %v1946 = vpop.f32.mrb[0].mxu0
    %v1947 = vadd.f32 0.0, %v1946
    %1948 = vmatprep.mubr.bf16.mxu0 0
    %1949 = vmatmul.mubr.bf16.gmra.mrb[0].mxu0 %v1846
    %v1950 = vpop.f32.mrb[0].mxu0
    %v1951 = vadd.f32 0.0, %v1950
    %v1952 = vpop.f32.mrb[0].mxu0
    %v1953 = vadd.f32 0.0, %v1952
    %v1954 = vpop.f32.mrb[0].mxu0
    %v1955 = vadd.f32 0.0, %v1954
    %v1956 = vpop.f32.mrb[0].mxu0
    %v1957 = vadd.f32 0.0, %v1956
    %1958 = vmatprep.mubr.bf16.mxu0 0
    %1959 = vmatmul.mubr.bf16.gmra.mrb[0].mxu0 %v1847
    %v1960 = vpop.f32.mrb[0].mxu0
    %v1961 = vadd.f32 0.0, %v1960
    %v1962 = vpop.f32.mrb[0].mxu0
    %v1963 = vadd.f32 0.0, %v1962
    %v1964 = vpop.f32.mrb[0].mxu0
    %v1965 = vadd.f32 0.0, %v1964
    %v1966 = vpop.f32.mrb[0].mxu0
    %v1967 = vadd.f32 0.0, %v1966
    %1968 = vmatprep.mubr.bf16.mxu0 0
    %1969 = vmatmul.mubr.bf16.gmra.mrb[0].mxu0 %v1848
    %v1970 = vpop.f32.mrb[0].mxu0
    %v1971 = vpop.f32.mrb[0].mxu0
    %v1972 = vadd.f32 0.0, %v1971
    %v1973 = vpop.f32.mrb[0].mxu0
    %v1974 = vpop.f32.mrb[0].mxu0
    %v1975 = vadd.f32 0.0, %v1974
    %1976 = vmatprep.mubr.bf16.mxu0 0
    %1977 = vmatmul.mubr.bf16.gmra.mrb[0].mxu0 %v1849
    %v1978 = vpop.f32.mrb[0].mxu0
    %v1979 = vpop.f32.mrb[0].mxu0
    %v1980 = vadd.f32 0.0, %v1979
    %v1981 = vpop.f32.mrb[0].mxu0
    %v1982 = vpop.f32.mrb[0].mxu0
    %v1983 = vadd.f32 0.0, %v1982
    %1984 = vmatprep.mubr.bf16.mxu0 0
    %1985 = vmatmul.mubr.bf16.gmra.mrb[0].mxu0 %v1850
    %v1986 = vpop.f32.mrb[0].mxu0
    %v1987 = vpop.f32.mrb[0].mxu0
    %v1988 = vadd.f32 0.0, %v1987
    %v1989 = vpop.f32.mrb[0].mxu0
    %v1990 = vpop.f32.mrb[0].mxu0
    %v1991 = vadd.f32 0.0, %v1990
    %1992 = vmatprep.mubr.bf16.mxu0 0
    %1993 = vmatmul.mubr.bf16.gmra.mrb[0].mxu0 %v1851
    %v1994 = vpop.f32.mrb[0].mxu0
    %v1995 = vpop.f32.mrb[0].mxu0
    %v1996 = vadd.f32 0.0, %v1995
    %v1997 = vpop.f32.mrb[0].mxu0
    %v1998 = vpop.f32.mrb[0].mxu0
    %v1999 = vadd.f32 0.0, %v1998
    %2000 = vmatprep.mubr.bf16.mxu0 0
    %2001 = vmatmul.mubr.bf16.gmra.mrb[0].mxu0 %v1852
    %v2002 = vpop.f32.mrb[0].mxu0
    %v2003 = vpop.f32.mrb[0].mxu0
    %v2004 = vadd.f32 0.0, %v2003
    %v2005 = vpop.f32.mrb[0].mxu0
    %v2006 = vpop.f32.mrb[0].mxu0
    %v2007 = vadd.f32 0.0, %v2006
    %2008 = vmatprep.mubr.bf16.mxu0 0
    %2009 = vmatmul.mubr.bf16.gmra.mrb[0].mxu0 %v1853
    %v2010 = vpop.f32.mrb[0].mxu0
    %v2011 = vpop.f32.mrb[0].mxu0
    %v2012 = vadd.f32 0.0, %v2011
    %v2013 = vpop.f32.mrb[0].mxu0
    %v2014 = vpop.f32.mrb[0].mxu0
    %v2015 = vadd.f32 0.0, %v2014
    %2016 = vmatprep.mubr.bf16.mxu0 0
    %2017 = vmatmul.mubr.bf16.gmra.mrb[0].mxu0 %v1854
    %v2018 = vpop.f32.mrb[0].mxu0
    %v2019 = vpop.f32.mrb[0].mxu0
    %v2020 = vadd.f32 0.0, %v2019
    %v2021 = vpop.f32.mrb[0].mxu0
    %v2022 = vpop.f32.mrb[0].mxu0
    %v2023 = vadd.f32 0.0, %v2022
    %2024 = vmatprep.mubr.bf16.mxu0 0
    %2025 = vmatmul.mubr.bf16.gmra.mrb[0].mxu0 %v1855
    %v2026 = vpop.f32.mrb[0].mxu0
    %v2027 = vpop.f32.mrb[0].mxu0
    %v2028 = vadd.f32 0.0, %v2027
    %v2029 = vpop.f32.mrb[0].mxu0
    %v2030 = vpop.f32.mrb[0].mxu0
    %v2031 = vadd.f32 0.0, %v2030
    %2032 = vdwg.mxu0
    %v2033 = vadd.f32 %v1972, %v1891
    %v2034 = vadd.f32 %v1975, %v1895
    %v2035 = vadd.f32 %v1980, %v1901
    %v2036 = vadd.f32 %v1983, %v1905
    %v2037 = vadd.f32 %v1988, %v1911
    %v2038 = vadd.f32 %v1991, %v1915
    %v2039 = vadd.f32 %v1996, %v1921
    %v2040 = vadd.f32 %v1999, %v1925
    %v2041 = vadd.f32 %v2004, %v1931
    %v2042 = vadd.f32 %v2007, %v1935
    %v2043 = vadd.f32 %v2012, %v1941
    %v2044 = vadd.f32 %v2015, %v1945
    %v2045 = vadd.f32 %v2020, %v1951
    %v2046 = vadd.f32 %v2023, %v1955
    %v2047 = vadd.f32 %v2028, %v1961
    %v2048 = vadd.f32 %v2031, %v1965
    %v2049 = vmul.f32 %v2033, 0.5
    %v2050 = vmul.f32 %v2034, 0.5
    %v2051 = vmul.f32 %v2035, 0.5
    %v2052 = vmul.f32 %v2036, 0.5
    %v2053 = vmul.f32 %v2037, 0.5
    %v2054 = vmul.f32 %v2038, 0.5
    %v2055 = vmul.f32 %v2039, 0.5
    %v2056 = vmul.f32 %v2040, 0.5
    %v2057 = vmul.f32 %v2041, 0.5
    %v2058 = vmul.f32 %v2042, 0.5
    %v2059 = vmul.f32 %v2043, 0.5
    %v2060 = vmul.f32 %v2044, 0.5
    %v2061 = vmul.f32 %v2045, 0.5
    %v2062 = vmul.f32 %v2046, 0.5
    %v2063 = vmul.f32 %v2047, 0.5
    %v2064 = vmul.f32 %v2048, 0.5
    %2065 = vmax.xlane.f32.xlu0 %v2049
    %v2066 = vpop.xlane.xlu0 %2065
    %2067 = vmax.xlane.f32.xlu0 %v2050
    %v2068 = vpop.xlane.xlu0 %2067
    %2069 = vmax.xlane.f32.xlu0 %v2051
    %v2070 = vpop.xlane.xlu0 %2069
    %2071 = vmax.xlane.f32.xlu0 %v2052
    %v2072 = vpop.xlane.xlu0 %2071
    %2073 = vmax.xlane.f32.xlu0 %v2053
    %v2074 = vpop.xlane.xlu0 %2073
    %2075 = vmax.xlane.f32.xlu0 %v2054
    %v2076 = vpop.xlane.xlu0 %2075
    %2077 = vmax.xlane.f32.xlu0 %v2055
    %v2078 = vpop.xlane.xlu0 %2077
    %2079 = vmax.xlane.f32.xlu0 %v2056
    %v2080 = vpop.xlane.xlu0 %2079
    %2081 = vmax.xlane.f32.xlu0 %v2057
    %v2082 = vpop.xlane.xlu0 %2081
    %2083 = vmax.xlane.f32.xlu0 %v2058
    %v2084 = vpop.xlane.xlu0 %2083
    %2085 = vmax.xlane.f32.xlu0 %v2059
    %v2086 = vpop.xlane.xlu0 %2085
    %2087 = vmax.xlane.f32.xlu0 %v2060
    %v2088 = vpop.xlane.xlu0 %2087
    %2089 = vmax.xlane.f32.xlu0 %v2061
    %v2090 = vpop.xlane.xlu0 %2089
    %2091 = vmax.xlane.f32.xlu0 %v2062
    %v2092 = vpop.xlane.xlu0 %2091
    %2093 = vmax.xlane.f32.xlu0 %v2063
    %v2094 = vpop.xlane.xlu0 %2093
    %2095 = vmax.xlane.f32.xlu0 %v2064
    %v2096 = vpop.xlane.xlu0 %2095
    %v2097 = vsub.f32 %v2049, %v2066
    %v2098 = vsub.f32 %v2050, %v2068
    %v2099 = vsub.f32 %v2051, %v2070
    %v2100 = vsub.f32 %v2052, %v2072
    %v2101 = vsub.f32 %v2053, %v2074
    %v2102 = vsub.f32 %v2054, %v2076
    %v2103 = vsub.f32 %v2055, %v2078
    %v2104 = vsub.f32 %v2056, %v2080
    %v2105 = vsub.f32 %v2057, %v2082
    %v2106 = vsub.f32 %v2058, %v2084
    %v2107 = vsub.f32 %v2059, %v2086
    %v2108 = vsub.f32 %v2060, %v2088
    %v2109 = vsub.f32 %v2061, %v2090
    %v2110 = vsub.f32 %v2062, %v2092
    %v2111 = vsub.f32 %v2063, %v2094
    %v2112 = vsub.f32 %v2064, %v2096
    %v2113 = vmul.f32 %v2097, 1.442695
    %v2114 = vpow.pop %v2113
    %v2115 = vmul.f32 %v2098, 1.442695
    %v2116 = vpow.pop %v2115
    %v2117 = vmul.f32 %v2099, 1.442695
    %v2118 = vpow.pop %v2117
    %v2119 = vmul.f32 %v2100, 1.442695
    %v2120 = vpow.pop %v2119
    %v2121 = vmul.f32 %v2101, 1.442695
    %v2122 = vpow.pop %v2121
    %v2123 = vmul.f32 %v2102, 1.442695
    %v2124 = vpow.pop %v2123
    %v2125 = vmul.f32 %v2103, 1.442695
    %v2126 = vpow.pop %v2125
    %v2127 = vmul.f32 %v2104, 1.442695
    %v2128 = vpow.pop %v2127
    %v2129 = vmul.f32 %v2105, 1.442695
    %v2130 = vpow.pop %v2129
    %v2131 = vmul.f32 %v2106, 1.442695
    %v2132 = vpow.pop %v2131
    %v2133 = vmul.f32 %v2107, 1.442695
    %v2134 = vpow.pop %v2133
    %v2135 = vmul.f32 %v2108, 1.442695
    %v2136 = vpow.pop %v2135
    %v2137 = vmul.f32 %v2109, 1.442695
    %v2138 = vpow.pop %v2137
    %v2139 = vmul.f32 %v2110, 1.442695
    %v2140 = vpow.pop %v2139
    %v2141 = vmul.f32 %v2111, 1.442695
    %v2142 = vpow.pop %v2141
    %v2143 = vmul.f32 %v2112, 1.442695
    %v2144 = vpow.pop %v2143
    %2145 = vadd.xlane.f32.xlu0 %v2114
    %v2146 = vpop.xlane.xlu0 %2145
    %2147 = vadd.xlane.f32.xlu0 %v2116
    %v2148 = vpop.xlane.xlu0 %2147
    %2149 = vadd.xlane.f32.xlu0 %v2118
    %v2150 = vpop.xlane.xlu0 %2149
    %2151 = vadd.xlane.f32.xlu0 %v2120
    %v2152 = vpop.xlane.xlu0 %2151
    %2153 = vadd.xlane.f32.xlu0 %v2122
    %v2154 = vpop.xlane.xlu0 %2153
    %2155 = vadd.xlane.f32.xlu0 %v2124
    %v2156 = vpop.xlane.xlu0 %2155
    %2157 = vadd.xlane.f32.xlu0 %v2126
    %v2158 = vpop.xlane.xlu0 %2157
    %2159 = vadd.xlane.f32.xlu0 %v2128
    %v2160 = vpop.xlane.xlu0 %2159
    %2161 = vadd.xlane.f32.xlu0 %v2130
    %v2162 = vpop.xlane.xlu0 %2161
    %2163 = vadd.xlane.f32.xlu0 %v2132
    %v2164 = vpop.xlane.xlu0 %2163
    %2165 = vadd.xlane.f32.xlu0 %v2134
    %v2166 = vpop.xlane.xlu0 %2165
    %2167 = vadd.xlane.f32.xlu0 %v2136
    %v2168 = vpop.xlane.xlu0 %2167
    %2169 = vadd.xlane.f32.xlu0 %v2138
    %v2170 = vpop.xlane.xlu0 %2169
    %2171 = vadd.xlane.f32.xlu0 %v2140
    %v2172 = vpop.xlane.xlu0 %2171
    %2173 = vadd.xlane.f32.xlu0 %v2142
    %v2174 = vpop.xlane.xlu0 %2173
    %2175 = vadd.xlane.f32.xlu0 %v2144
    %v2176 = vpop.xlane.xlu0 %2175
    %v2177 = vrcp.pop %v2146
    %v2178 = vmul.f32 %v2114, %v2177
    %v2179 = vrcp.pop %v2148
    %v2180 = vmul.f32 %v2116, %v2179
    %v2181 = vrcp.pop %v2150
    %v2182 = vmul.f32 %v2118, %v2181
    %v2183 = vrcp.pop %v2152
    %v2184 = vmul.f32 %v2120, %v2183
    %v2185 = vrcp.pop %v2154
    %v2186 = vmul.f32 %v2122, %v2185
    %v2187 = vrcp.pop %v2156
    %v2188 = vmul.f32 %v2124, %v2187
    %v2189 = vrcp.pop %v2158
    %v2190 = vmul.f32 %v2126, %v2189
    %v2191 = vrcp.pop %v2160
    %v2192 = vmul.f32 %v2128, %v2191
    %v2193 = vrcp.pop %v2162
    %v2194 = vmul.f32 %v2130, %v2193
    %v2195 = vrcp.pop %v2164
    %v2196 = vmul.f32 %v2132, %v2195
    %v2197 = vrcp.pop %v2166
    %v2198 = vmul.f32 %v2134, %v2197
    %v2199 = vrcp.pop %v2168
    %v2200 = vmul.f32 %v2136, %v2199
    %v2201 = vrcp.pop %v2170
    %v2202 = vmul.f32 %v2138, %v2201
    %v2203 = vrcp.pop %v2172
    %v2204 = vmul.f32 %v2140, %v2203
    %v2205 = vrcp.pop %v2174
    %v2206 = vmul.f32 %v2142, %v2205
    %v2207 = vrcp.pop %v2176
    %v2208 = vmul.f32 %v2144, %v2207
    %2209 = vmax.xlane.f32.xlu0 %v1893
    %v2210 = vpop.xlane.xlu0 %2209
    %2211 = vmax.xlane.f32.xlu0 %v1897
    %v2212 = vpop.xlane.xlu0 %2211
    %2213 = vmax.xlane.f32.xlu0 %v1903
    %v2214 = vpop.xlane.xlu0 %2213
    %2215 = vmax.xlane.f32.xlu0 %v1907
    %v2216 = vpop.xlane.xlu0 %2215
    %2217 = vmax.xlane.f32.xlu0 %v1913
    %v2218 = vpop.xlane.xlu0 %2217
    %2219 = vmax.xlane.f32.xlu0 %v1917
    %v2220 = vpop.xlane.xlu0 %2219
    %2221 = vmax.xlane.f32.xlu0 %v1923
    %v2222 = vpop.xlane.xlu0 %2221
    %2223 = vmax.xlane.f32.xlu0 %v1927
    %v2224 = vpop.xlane.xlu0 %2223
    %2225 = vmax.xlane.f32.xlu0 %v1933
    %v2226 = vpop.xlane.xlu0 %2225
    %2227 = vmax.xlane.f32.xlu0 %v1937
    %v2228 = vpop.xlane.xlu0 %2227
    %2229 = vmax.xlane.f32.xlu0 %v1943
    %v2230 = vpop.xlane.xlu0 %2229
    %2231 = vmax.xlane.f32.xlu0 %v1947
    %v2232 = vpop.xlane.xlu0 %2231
    %2233 = vmax.xlane.f32.xlu0 %v1953
    %v2234 = vpop.xlane.xlu0 %2233
    %2235 = vmax.xlane.f32.xlu0 %v1957
    %v2236 = vpop.xlane.xlu0 %2235
    %2237 = vmax.xlane.f32.xlu0 %v1963
    %v2238 = vpop.xlane.xlu0 %2237
    %2239 = vmax.xlane.f32.xlu0 %v1967
    %v2240 = vpop.xlane.xlu0 %2239
    %v2241 = vsub.f32 %v1893, %v2210
    %v2242 = vsub.f32 %v1897, %v2212
    %v2243 = vsub.f32 %v1903, %v2214
    %v2244 = vsub.f32 %v1907, %v2216
    %v2245 = vsub.f32 %v1913, %v2218
    %v2246 = vsub.f32 %v1917, %v2220
    %v2247 = vsub.f32 %v1923, %v2222
    %v2248 = vsub.f32 %v1927, %v2224
    %v2249 = vsub.f32 %v1933, %v2226
    %v2250 = vsub.f32 %v1937, %v2228
    %v2251 = vsub.f32 %v1943, %v2230
    %v2252 = vsub.f32 %v1947, %v2232
    %v2253 = vsub.f32 %v1953, %v2234
    %v2254 = vsub.f32 %v1957, %v2236
    %v2255 = vsub.f32 %v1963, %v2238
    %v2256 = vsub.f32 %v1967, %v2240
    %v2257 = vmul.f32 %v2241, 1.442695
    %v2258 = vpow.pop %v2257
    %v2259 = vmul.f32 %v2242, 1.442695
    %v2260 = vpow.pop %v2259
    %v2261 = vmul.f32 %v2243, 1.442695
    %v2262 = vpow.pop %v2261
    %v2263 = vmul.f32 %v2244, 1.442695
    %v2264 = vpow.pop %v2263
    %v2265 = vmul.f32 %v2245, 1.442695
    %v2266 = vpow.pop %v2265
    %v2267 = vmul.f32 %v2246, 1.442695
    %v2268 = vpow.pop %v2267
    %v2269 = vmul.f32 %v2247, 1.442695
    %v2270 = vpow.pop %v2269
    %v2271 = vmul.f32 %v2248, 1.442695
    %v2272 = vpow.pop %v2271
    %v2273 = vmul.f32 %v2249, 1.442695
    %v2274 = vpow.pop %v2273
    %v2275 = vmul.f32 %v2250, 1.442695
    %v2276 = vpow.pop %v2275
    %v2277 = vmul.f32 %v2251, 1.442695
    %v2278 = vpow.pop %v2277
    %v2279 = vmul.f32 %v2252, 1.442695
    %v2280 = vpow.pop %v2279
    %v2281 = vmul.f32 %v2253, 1.442695
    %v2282 = vpow.pop %v2281
    %v2283 = vmul.f32 %v2254, 1.442695
    %v2284 = vpow.pop %v2283
    %v2285 = vmul.f32 %v2255, 1.442695
    %v2286 = vpow.pop %v2285
    %v2287 = vmul.f32 %v2256, 1.442695
    %v2288 = vpow.pop %v2287
    %2289 = vadd.xlane.f32.xlu0 %v2258
    %v2290 = vpop.xlane.xlu0 %2289
    %2291 = vadd.xlane.f32.xlu0 %v2260
    %v2292 = vpop.xlane.xlu0 %2291
    %2293 = vadd.xlane.f32.xlu0 %v2262
    %v2294 = vpop.xlane.xlu0 %2293
    %2295 = vadd.xlane.f32.xlu0 %v2264
    %v2296 = vpop.xlane.xlu0 %2295
    %2297 = vadd.xlane.f32.xlu0 %v2266
    %v2298 = vpop.xlane.xlu0 %2297
    %2299 = vadd.xlane.f32.xlu0 %v2268
    %v2300 = vpop.xlane.xlu0 %2299
    %2301 = vadd.xlane.f32.xlu0 %v2270
    %v2302 = vpop.xlane.xlu0 %2301
    %2303 = vadd.xlane.f32.xlu0 %v2272
    %v2304 = vpop.xlane.xlu0 %2303
    %2305 = vadd.xlane.f32.xlu0 %v2274
    %v2306 = vpop.xlane.xlu0 %2305
    %2307 = vadd.xlane.f32.xlu0 %v2276
    %v2308 = vpop.xlane.xlu0 %2307
    %2309 = vadd.xlane.f32.xlu0 %v2278
    %v2310 = vpop.xlane.xlu0 %2309
    %2311 = vadd.xlane.f32.xlu0 %v2280
    %v2312 = vpop.xlane.xlu0 %2311
    %2313 = vadd.xlane.f32.xlu0 %v2282
    %v2314 = vpop.xlane.xlu0 %2313
    %2315 = vadd.xlane.f32.xlu0 %v2284
    %v2316 = vpop.xlane.xlu0 %2315
    %2317 = vadd.xlane.f32.xlu0 %v2286
    %v2318 = vpop.xlane.xlu0 %2317
    %2319 = vadd.xlane.f32.xlu0 %v2288
    %v2320 = vpop.xlane.xlu0 %2319
    %v2321 = vlog2.pop %v2290
    %v2322 = vmul.f32 %v2321, 0.6931472
    %v2323 = vlog2.pop %v2292
    %v2324 = vmul.f32 %v2323, 0.6931472
    %v2325 = vlog2.pop %v2294
    %v2326 = vmul.f32 %v2325, 0.6931472
    %v2327 = vlog2.pop %v2296
    %v2328 = vmul.f32 %v2327, 0.6931472
    %v2329 = vlog2.pop %v2298
    %v2330 = vmul.f32 %v2329, 0.6931472
    %v2331 = vlog2.pop %v2300
    %v2332 = vmul.f32 %v2331, 0.6931472
    %v2333 = vlog2.pop %v2302
    %v2334 = vmul.f32 %v2333, 0.6931472
    %v2335 = vlog2.pop %v2304
    %v2336 = vmul.f32 %v2335, 0.6931472
    %v2337 = vlog2.pop %v2306
    %v2338 = vmul.f32 %v2337, 0.6931472
    %v2339 = vlog2.pop %v2308
    %v2340 = vmul.f32 %v2339, 0.6931472
    %v2341 = vlog2.pop %v2310
    %v2342 = vmul.f32 %v2341, 0.6931472
    %v2343 = vlog2.pop %v2312
    %v2344 = vmul.f32 %v2343, 0.6931472
    %v2345 = vlog2.pop %v2314
    %v2346 = vmul.f32 %v2345, 0.6931472
    %v2347 = vlog2.pop %v2316
    %v2348 = vmul.f32 %v2347, 0.6931472
    %v2349 = vlog2.pop %v2318
    %v2350 = vmul.f32 %v2349, 0.6931472
    %v2351 = vlog2.pop %v2320
    %v2352 = vmul.f32 %v2351, 0.6931472
    %v2353 = vadd.f32 %v2210, %v2322
    %v2354 = vadd.f32 %v2212, %v2324
    %v2355 = vadd.f32 %v2214, %v2326
    %v2356 = vadd.f32 %v2216, %v2328
    %v2357 = vadd.f32 %v2218, %v2330
    %v2358 = vadd.f32 %v2220, %v2332
    %v2359 = vadd.f32 %v2222, %v2334
    %v2360 = vadd.f32 %v2224, %v2336
    %v2361 = vadd.f32 %v2226, %v2338
    %v2362 = vadd.f32 %v2228, %v2340
    %v2363 = vadd.f32 %v2230, %v2342
    %v2364 = vadd.f32 %v2232, %v2344
    %v2365 = vadd.f32 %v2234, %v2346
    %v2366 = vadd.f32 %v2236, %v2348
    %v2367 = vadd.f32 %v2238, %v2350
    %v2368 = vadd.f32 %v2240, %v2352
    %v2369 = vmax.f32 %v1893, %v1913
    %v2370 = vmax.f32 %v1897, %v1917
    %v2371 = vmax.f32 %v1903, %v1923
    %v2372 = vmax.f32 %v1907, %v1927
    %v2373 = vmax.f32 %v2369, %v1933
    %v2374 = vmax.f32 %v2370, %v1937
    %v2375 = vmax.f32 %v2371, %v1943
    %v2376 = vmax.f32 %v2372, %v1947
    %v2377 = vmax.f32 %v2373, %v1953
    %v2378 = vmax.f32 %v2374, %v1957
    %v2379 = vmax.f32 %v2375, %v1963
    %v2380 = vmax.f32 %v2376, %v1967
    %v2381 = vmax.f32 %v2377, %v2378
    %v2382 = vmax.f32 %v2379, %v2380
    %v2383 = vmax.f32 %v2381, %v2382
    %v2384 = vrot.slane %v2383, 4
    %v2385 = vmax.f32 %v2383, %v2384
    %v2386 = vrot.slane %v2385, 2
    %v2387 = vmax.f32 %v2385, %v2386
    %v2388 = vrot.slane %v2387, 1
    %v2389 = vmax.f32 %v2387, %v2388
    %v2390 = vsub.f32 %v1893, %v2389
    %v2391 = vsub.f32 %v1897, %v2389
    %v2392 = vsub.f32 %v1903, %v2389
    %v2393 = vsub.f32 %v1907, %v2389
    %v2394 = vsub.f32 %v1913, %v2389
    %v2395 = vsub.f32 %v1917, %v2389
    %v2396 = vsub.f32 %v1923, %v2389
    %v2397 = vsub.f32 %v1927, %v2389
    %v2398 = vsub.f32 %v1933, %v2389
    %v2399 = vsub.f32 %v1937, %v2389
    %v2400 = vsub.f32 %v1943, %v2389
    %v2401 = vsub.f32 %v1947, %v2389
    %v2402 = vsub.f32 %v1953, %v2389
    %v2403 = vsub.f32 %v1957, %v2389
    %v2404 = vsub.f32 %v1963, %v2389
    %v2405 = vsub.f32 %v1967, %v2389
    %v2406 = vmul.f32 %v2390, 1.442695
    %v2407 = vpow.pop %v2406
    %v2408 = vmul.f32 %v2391, 1.442695
    %v2409 = vpow.pop %v2408
    %v2410 = vmul.f32 %v2392, 1.442695
    %v2411 = vpow.pop %v2410
    %v2412 = vmul.f32 %v2393, 1.442695
    %v2413 = vpow.pop %v2412
    %v2414 = vmul.f32 %v2394, 1.442695
    %v2415 = vpow.pop %v2414
    %v2416 = vmul.f32 %v2395, 1.442695
    %v2417 = vpow.pop %v2416
    %v2418 = vmul.f32 %v2396, 1.442695
    %v2419 = vpow.pop %v2418
    %v2420 = vmul.f32 %v2397, 1.442695
    %v2421 = vpow.pop %v2420
    %v2422 = vmul.f32 %v2398, 1.442695
    %v2423 = vpow.pop %v2422
    %v2424 = vmul.f32 %v2399, 1.442695
    %v2425 = vpow.pop %v2424
    %v2426 = vmul.f32 %v2400, 1.442695
    %v2427 = vpow.pop %v2426
    %v2428 = vmul.f32 %v2401, 1.442695
    %v2429 = vpow.pop %v2428
    %v2430 = vmul.f32 %v2402, 1.442695
    %v2431 = vpow.pop %v2430
    %v2432 = vmul.f32 %v2403, 1.442695
    %v2433 = vpow.pop %v2432
    %v2434 = vmul.f32 %v2404, 1.442695
    %v2435 = vpow.pop %v2434
    %v2436 = vmul.f32 %v2405, 1.442695
    %v2437 = vpow.pop %v2436
    %v2438 = vadd.f32 %v2407, %v2409
    %v2439 = vadd.f32 %v2438, %v2411
    %v2440 = vadd.f32 %v2439, %v2413
    %v2441 = vadd.f32 %v2440, %v2415
    %v2442 = vadd.f32 %v2441, %v2417
    %v2443 = vadd.f32 %v2442, %v2419
    %v2444 = vadd.f32 %v2443, %v2421
    %v2445 = vadd.f32 %v2444, %v2423
    %v2446 = vadd.f32 %v2445, %v2425
    %v2447 = vadd.f32 %v2446, %v2427
    %v2448 = vadd.f32 %v2447, %v2429
    %v2449 = vadd.f32 %v2448, %v2431
    %v2450 = vadd.f32 %v2449, %v2433
    %v2451 = vadd.f32 %v2450, %v2435
    %v2452 = vadd.f32 %v2451, %v2437
    %v2453 = vrot.slane %v2452, 4
    %v2454 = vadd.f32 %v2452, %v2453
    %v2455 = vrot.slane %v2454, 2
    %v2456 = vadd.f32 %v2454, %v2455
    %v2457 = vrot.slane %v2456, 1
    %v2458 = vadd.f32 %v2456, %v2457
    %v2459 = vlog2.pop %v2458
    %v2460 = vmul.f32 %v2459, 0.6931472
    %v2461 = vadd.f32 %v2389, %v2460
    %v2462 = vmul.f32 %v1893, 2.0
    %v2463 = vmul.f32 %v1897, 2.0
    %v2464 = vmul.f32 %v1903, 2.0
    %v2465 = vmul.f32 %v1907, 2.0
    %v2466 = vmul.f32 %v1913, 2.0
    %v2467 = vmul.f32 %v1917, 2.0
    %v2468 = vmul.f32 %v1923, 2.0
    %v2469 = vmul.f32 %v1927, 2.0
    %v2470 = vmul.f32 %v1933, 2.0
    %v2471 = vmul.f32 %v1937, 2.0
    %v2472 = vmul.f32 %v1943, 2.0
    %v2473 = vmul.f32 %v1947, 2.0
    %v2474 = vmul.f32 %v1953, 2.0
    %v2475 = vmul.f32 %v1957, 2.0
    %v2476 = vmul.f32 %v1963, 2.0
    %v2477 = vmul.f32 %v1967, 2.0
    %v2478 = vsub.f32 %v2462, %v2353
    %v2479 = vsub.f32 %v2463, %v2354
    %v2480 = vsub.f32 %v2464, %v2355
    %v2481 = vsub.f32 %v2465, %v2356
    %v2482 = vsub.f32 %v2466, %v2357
    %v2483 = vsub.f32 %v2467, %v2358
    %v2484 = vsub.f32 %v2468, %v2359
    %v2485 = vsub.f32 %v2469, %v2360
    %v2486 = vsub.f32 %v2470, %v2361
    %v2487 = vsub.f32 %v2471, %v2362
    %v2488 = vsub.f32 %v2472, %v2363
    %v2489 = vsub.f32 %v2473, %v2364
    %v2490 = vsub.f32 %v2474, %v2365
    %v2491 = vsub.f32 %v2475, %v2366
    %v2492 = vsub.f32 %v2476, %v2367
    %v2493 = vsub.f32 %v2477, %v2368
    %v2494 = vsub.f32 %v2478, %v2461
    %v2495 = vsub.f32 %v2479, %v2461
    %v2496 = vsub.f32 %v2480, %v2461
    %v2497 = vsub.f32 %v2481, %v2461
    %v2498 = vsub.f32 %v2482, %v2461
    %v2499 = vsub.f32 %v2483, %v2461
    %v2500 = vsub.f32 %v2484, %v2461
    %v2501 = vsub.f32 %v2485, %v2461
    %v2502 = vsub.f32 %v2486, %v2461
    %v2503 = vsub.f32 %v2487, %v2461
    %v2504 = vsub.f32 %v2488, %v2461
    %v2505 = vsub.f32 %v2489, %v2461
    %v2506 = vsub.f32 %v2490, %v2461
    %v2507 = vsub.f32 %v2491, %v2461
    %v2508 = vsub.f32 %v2492, %v2461
    %v2509 = vsub.f32 %v2493, %v2461
    %v2510 = vmul.f32 %v2178, %v2494
    %v2511 = vmul.f32 %v2180, %v2495
    %v2512 = vmul.f32 %v2182, %v2496
    %v2513 = vmul.f32 %v2184, %v2497
    %v2514 = vmul.f32 %v2186, %v2498
    %v2515 = vmul.f32 %v2188, %v2499
    %v2516 = vmul.f32 %v2190, %v2500
    %v2517 = vmul.f32 %v2192, %v2501
    %v2518 = vmul.f32 %v2194, %v2502
    %v2519 = vmul.f32 %v2196, %v2503
    %v2520 = vmul.f32 %v2198, %v2504
    %v2521 = vmul.f32 %v2200, %v2505
    %v2522 = vmul.f32 %v2202, %v2506
    %v2523 = vmul.f32 %v2204, %v2507
    %v2524 = vmul.f32 %v2206, %v2508
    %v2525 = vmul.f32 %v2208, %v2509
    %v2526 = vadd.f32 %v2510, %v2511
    %v2527 = vadd.f32 %v2526, %v2512
    %v2528 = vadd.f32 %v2527, %v2513
    %v2529 = vadd.f32 %v2528, %v2514
    %v2530 = vadd.f32 %v2529, %v2515
    %v2531 = vadd.f32 %v2530, %v2516
    %v2532 = vadd.f32 %v2531, %v2517
    %v2533 = vadd.f32 %v2532, %v2518
    %v2534 = vadd.f32 %v2533, %v2519
    %v2535 = vadd.f32 %v2534, %v2520
    %v2536 = vadd.f32 %v2535, %v2521
    %v2537 = vadd.f32 %v2536, %v2522
    %v2538 = vadd.f32 %v2537, %v2523
    %v2539 = vadd.f32 %v2538, %v2524
    %v2540 = vadd.f32 %v2539, %v2525
    %2541 = vadd.xlane.f32.xlu0 %v2540
    %v2542 = vpop.xlane.xlu0 %2541
    %v2543 = vrot.slane %v2542, 4
    %v2544 = vadd.f32 %v2542, %v2543
    %v2545 = vrot.slane %v2544, 2
    %v2546 = vadd.f32 %v2544, %v2545
    %v2547 = vrot.slane %v2546, 1
    %v2548 = vadd.f32 %v2546, %v2547
    %s2549 = vtos %v2548
    %s2550 = smul.f32 %s2549, -0.00390625
    %s2551 = scalar_lea.smem [#allocation14], 0
    %2552 = sst [smem:[%s2551]] %s2550
    // Predicated region
    $region82: #{tpu_custom_call.1} parent=1 // pred_check
      _
    $region83: #{tpu_custom_call.1} parent=1 // pred_check_branch
      %2554 = sbr.rel (0) target = $region85
    $region84: #{tpu_custom_call.1} parent=1 // pred_region
      %s2556 = ssub.s32 16, 16
      %2557 = vsyncadd [#allocation5], %s2556
      %2560 = dma.smem_to_hbm [#allocation14], 16, %s14, [#allocation5]
    $region85: #{tpu_custom_call.1} parent=1 // pred_fallthru
      _
    // Predicated region
    $region86: #{tpu_custom_call.1} parent=1 // pred_check
      _
    $region87: #{tpu_custom_call.1} parent=1 // pred_check_branch
      %2562 = sbr.rel (0) target = $region89
    $region88: #{tpu_custom_call.1} parent=1 // pred_region
      %2563 = dma.done [#allocation5], 16
    $region89: #{tpu_custom_call.1} parent=1 // pred_fallthru
      _
    %2564 = sfence
    %2565 = vsyncpa [#allocation4], 1
    %2566 = vsyncpa [#allocation7], 1
    %2567 = vsyncpa [#allocation10], 1
    %2568 = vsyncpa [#allocation13], 1
    %2569 = vsyncpa [#allocation5], 1

</llo_original>
